<compile_context>
chip_gen: v6e
topology: v6e:2x2x1
jax: 0.10.0
libtpu: 0.0.40
codegen_flags: <defaults>
</compile_context>

<pallas_src>
import functools

import numpy as np
import jax
import jax.numpy as jnp
from jax import lax
from jax.experimental import pallas as pl
from jax.experimental.pallas import tpu as pltpu


_VMEM = pl.BlockSpec(memory_space=pltpu.MemorySpace.VMEM)
_SMEM = pl.BlockSpec(memory_space=pltpu.MemorySpace.SMEM)

# Fixed static padded maxima -> kernel shapes never change with match counts.
MAX_MATCH = 128       # max matched det boxes / rel vectors (lanes of the slab)
EMB_MP = 128          # padded row count of the id-embedding Gram input
PULL_PP = 2 * 128     # padded row count of the pull-loss pair buffers

# lane index of each loss inside the fused f32[1, 128] output vector
_LOSS_LANE = {
    'loss_ce': 0,
    'cardinality_error': 1,
    'loss_bbox': 2,
    'loss_giou': 3,
    'rel_loss_ce': 4,
    'rel_cardinality_error': 5,
    'rel_loss_bbox': 6,
    'loss_push': 7,
    'loss_pull': 8,
}

# slots of the runtime-scalar SMEM vector (data-dependent values live here,
# NOT in static kwargs -> no retrace/recompile when match counts change)
(_S_NBOX, _S_NEMB, _S_INV_NBOXES, _S_INV_NREL,
 _S_INV_NPAIRS, _S_INV_PULL, _S_INV_BATCH) = range(7)
_NUM_SCALARS = 8


# --------------------------------------------------------------------------
# Fused Pallas kernel: all scalar losses in one invocation
# --------------------------------------------------------------------------
def _fused_loss_kernel(scal_ref, det_logits_ref, det_tgt_ref,
                       rel_logits_ref, rel_tgt_ref,
                       slab_ref, emb_ref, pull_ref, out_ref, *,
                       num_classes, eos_coef, alpha, gamma,
                       det_neg_class, rel_neg_class, margin):
    f32 = jnp.float32
    eps = 1e-7

    # runtime (data-dependent) normalizers from SMEM
    n_box_f = scal_ref[_S_NBOX]
    n_emb_f = scal_ref[_S_NEMB]
    inv_num_boxes = scal_ref[_S_INV_NBOXES]
    inv_num_rel = scal_ref[_S_INV_NREL]
    inv_npairs = scal_ref[_S_INV_NPAIRS]
    inv_pull_count = scal_ref[_S_INV_PULL]
    inv_batch = scal_ref[_S_INV_BATCH]

    # -------- det logits: read once, shared by CE and cardinality ----------
    x = det_logits_ref[...].astype(f32)                      # [B, Q, C+1]
    B = x.shape[0]
    tgt = det_tgt_ref[...]                                   # [B, Q, 1] int32

    # weighted cross entropy (torch F.cross_entropy w/ class weights, 'mean');
    # class-id iota only over the class lane, broadcast in the compare.
    cls_row = lax.broadcasted_iota(jnp.int32, (1, 1, x.shape[2]), 2)
    m = jnp.max(x, axis=-1, keepdims=True)
    lse = jnp.log(jnp.sum(jnp.exp(x - m), axis=-1, keepdims=True)) + m
    picked = jnp.sum(jnp.where(cls_row == tgt, x, 0.0), axis=-1, keepdims=True)
    nll = lse - picked                                       # [B, Q, 1]
    w = jnp.where(tgt == num_classes, eos_coef, 1.0)         # [B, Q, 1]
    loss_ce = jnp.sum(w * nll) / jnp.sum(w)

    # small slab: rows 0-7 box cxcywh (src/tgt), 8-15 rel vecs, 16..16+B-1 lens
    sm = slab_ref[...].astype(f32)                           # [16+pad, 128]
    det_lens = sm[16:16 + B, 0:1]                            # [B, 1]
    rel_lens = sm[16:16 + B, 1:2]                            # [B, 1]

    # cardinality: argmax != background  ==  fg_max {>,>=} bg_logit
    def card_err(xl, neg_class, lens, tie_to_fg):
        ids = lax.broadcasted_iota(jnp.int32, (1, 1, xl.shape[2]), 2)
        neg = ids == neg_class
        fg_max = jnp.max(jnp.where(neg, -3.0e38, xl), axis=-1)   # [B, Q]
        bg_val = jnp.sum(jnp.where(neg, xl, 0.0), axis=-1)       # [B, Q]
        hit = (fg_max >= bg_val) if tie_to_fg else (fg_max > bg_val)
        card = jnp.sum(hit.astype(f32), axis=1, keepdims=True)   # [B, 1]
        return jnp.sum(jnp.abs(card - lens)) * inv_batch

    # det background is the LAST class -> min-index argmax gives fg on ties
    cardinality_error = card_err(x, det_neg_class, det_lens, True)

    # -------- rel logits: read once, shared by focal BCE and cardinality ---
    xr = rel_logits_ref[...].astype(f32)                     # [B, Qr, R]
    tr = rel_tgt_ref[...].astype(f32)                        # bf16 {0,1} -> f32

    # multi-label focal loss, shared exp for sigmoid and softplus (exact sigmoid)
    e = jnp.exp(-jnp.abs(xr))
    inv1pe = 1.0 / (1.0 + e)
    p = jnp.where(xr >= 0.0, inv1pe, e * inv1pe)              # sigmoid(xr)
    pt = (1.0 - p) * tr + p * (1.0 - tr)
    if float(gamma) == float(int(gamma)) and int(gamma) >= 0:
        gi = int(gamma)
        pt_pow = jnp.ones_like(pt) if gi == 0 else pt
        for _ in range(max(gi - 1, 0)):
            pt_pow = pt_pow * pt
    else:  # non-integer gamma: exp/log form, guarded
        pt_pow = jnp.exp(gamma * jnp.log(jnp.maximum(pt, 1e-12)))
    fw = (alpha * tr + (1.0 - alpha) * (1.0 - tr)) * pt_pow
    bce = jnp.maximum(xr, 0.0) - xr * tr + jnp.log(1.0 + e)
    # torch reference uses loss_reduce='sum' (default) -> plain sum, no norm.
    rel_loss_ce = jnp.sum(bce * fw)

    # rel background is class 0 -> min-index argmax gives bg on ties
    rel_cardinality_error = card_err(xr, rel_neg_class, rel_lens, False)

    # -------- boxes: coordinate-major rows 0-3 = src cxcywh, 4-7 = tgt ------
    lane = lax.broadcasted_iota(jnp.int32, (1, 128), 1)
    lane_f = lane.astype(f32)
    bx = sm[0:8, :]
    # padded lanes are zero in both src & tgt -> contribute 0 to the L1 sum
    loss_bbox = jnp.sum(jnp.abs(bx[0:4] - bx[4:8])) * inv_num_boxes

    s_cx, s_cy, s_w, s_h = bx[0:1], bx[1:2], bx[2:3], bx[3:4]
    t_cx, t_cy, t_w, t_h = bx[4:5], bx[5:6], bx[6:7], bx[7:8]
    sx0, sy0 = s_cx - 0.5 * s_w, s_cy - 0.5 * s_h
    sx1, sy1 = s_cx + 0.5 * s_w, s_cy + 0.5 * s_h
    tx0, ty0 = t_cx - 0.5 * t_w, t_cy - 0.5 * t_h
    tx1, ty1 = t_cx + 0.5 * t_w, t_cy + 0.5 * t_h
    area_s = (sx1 - sx0) * (sy1 - sy0)
    area_t = (tx1 - tx0) * (ty1 - ty0)
    iw = jnp.maximum(jnp.minimum(sx1, tx1) - jnp.maximum(sx0, tx0), 0.0)
    ih = jnp.maximum(jnp.minimum(sy1, ty1) - jnp.maximum(sy0, ty0), 0.0)
    inter = iw * ih
    union = area_s + area_t - inter
    iou = inter / (union + eps)
    encl = (jnp.maximum(sx1, tx1) - jnp.minimum(sx0, tx0)) * \
           (jnp.maximum(sy1, ty1) - jnp.minimum(sy0, ty0))
    giou = iou - (encl - union) / (encl + eps)
    box_valid = lane_f < n_box_f                              # runtime count
    loss_giou = jnp.sum(jnp.where(box_valid, 1.0 - giou, 0.0)) * inv_num_boxes

    # -------- interaction vectors: rows 8-11 src, 12-15 tgt; L1 only --------
    vc = sm[8:16, :]
    rel_loss_bbox = jnp.sum(jnp.abs(vc[0:4] - vc[4:8])) * inv_num_rel

    # -------- emb push: transposed-RHS Gram matmul on the MXU ---------------
    e_id = emb_ref[...].astype(f32)                           # [Mp, Dp] zero-pad
    g = lax.dot_general(e_id, e_id,
                        dimension_numbers=(((1,), (1,)), ((), ())),
                        preferred_element_type=f32)           # e @ e.T  [Mp, Mp]
    n2 = jnp.sum(e_id * e_id, axis=1, keepdims=True)          # ||e_i||^2 [Mp, 1]
    d2 = jnp.maximum(n2 + jnp.transpose(n2) - 2.0 * g, 0.0)
    dist = jnp.sqrt(d2 + 1e-12)                               # eps: finite grad at 0
    hinge = jnp.maximum(margin - dist, 0.0)
    ri = lax.broadcasted_iota(jnp.int32, (e_id.shape[0], 1), 0).astype(f32)
    ci = lax.broadcasted_iota(jnp.int32, (1, e_id.shape[0]), 1).astype(f32)
    pair_mask = (ci < ri) & (ri < n_emb_f) & (ci < n_emb_f)
    loss_push = jnp.sum(jnp.where(pair_mask, hinge * hinge, 0.0)) * inv_npairs

    # -------- emb pull: plain MSE (rows / lanes zero-padded identically) ----
    pq = pull_ref[...].astype(f32)                            # [2, Pp, 128]
    dp = pq[0] - pq[1]
    loss_pull = jnp.sum(dp * dp) * inv_pull_count

    # -------- single lane-dense store of all scalar losses ------------------
    out = jnp.zeros((1, 128), f32)
    for name, val in (('loss_ce', loss_ce),
                      ('cardinality_error', cardinality_error),
                      ('loss_bbox', loss_bbox),
                      ('loss_giou', loss_giou),
                      ('rel_loss_ce', rel_loss_ce),
                      ('rel_cardinality_error', rel_cardinality_error),
                      ('rel_loss_bbox', rel_loss_bbox),
                      ('loss_push', loss_push),
                      ('loss_pull', loss_pull)):
        out = jnp.where(lane == _LOSS_LANE[name], val, out)
    out_ref[...] = out


def fused_set_criterion_losses(scalars, det_logits, det_tgt, rel_logits,
                               rel_tgt, small_slab, emb_pad, pull_pair, *,
                               num_classes, eos_coef, alpha, gamma,
                               det_neg_class, rel_neg_class, margin):
    kernel = functools.partial(
        _fused_loss_kernel, num_classes=num_classes, eos_coef=eos_coef,
        alpha=alpha, gamma=gamma, det_neg_class=det_neg_class,
        rel_neg_class=rel_neg_class, margin=margin)
    return pl.pallas_call(
        kernel,
        out_shape=jax.ShapeDtypeStruct((1, 128), jnp.float32),
        in_specs=[_SMEM] + [_VMEM] * 7,
        out_specs=_VMEM,
    )(scalars, det_logits, det_tgt, rel_logits, rel_tgt,
      small_slab, emb_pad, pull_pair)


# --------------------------------------------------------------------------
# SetCriterion forward (glue in plain JAX / numpy, hot path in one Pallas call)
# --------------------------------------------------------------------------
class SetCriterionPallas:
    def __init__(self, num_classes, rel_classes, eos_coef=0.1,
                 alpha=0.25, gamma=2, topk=5, margin=8.0):
        self.num_classes = num_classes
        self.rel_classes = rel_classes
        self.eos_coef = eos_coef
        self.alpha = alpha
        self.gamma = gamma
        self.topk = topk
        self.margin = margin

    @staticmethod
    def _src_perm(indices):
        batch_idx = np.concatenate(
            [np.full(len(src), i, dtype=np.int32) for i, (src, _) in enumerate(indices)])
        src_idx = np.concatenate([np.asarray(src, dtype=np.int32) for src, _ in indices])
        return batch_idx, src_idx

    def forward(self, outputs, targets, indices_dict):
        # TODO(synk): the Hungarian matcher (scipy linear_sum_assignment) is an
        # external module; matched indices come from the caller.
        det_logits = outputs['pred_det']['pred_logits']
        det_boxes = outputs['pred_det']['pred_boxes']
        id_emb = outputs['pred_det']['id_emb']
        rel_logits = outputs['pred_rel']['pred_logits']
        rel_boxes = outputs['pred_rel']['pred_boxes']
        src_emb = outputs['pred_rel']['src_emb']
        dst_emb = outputs['pred_rel']['dst_emb']

        B, Q, C1 = det_logits.shape
        _, Qr, R = rel_logits.shape

        det_indices = indices_dict['det']
        rel_indices = indices_dict['rel']
        det_b, det_s = self._src_perm(det_indices)
        rel_b, rel_s = self._src_perm(rel_indices)

        num_boxes = float(max(sum(len(t['labels']) for t in targets), 1))
        num_rel = float(max(sum(len(t['rel_labels']) for t in targets), 1))

        losses = {}

        # ----- CE target class ids (no dense one-hot; weight derived in-kernel)
        tgt_cls_o = jnp.concatenate(
            [targets[i]['labels'][np.asarray(J, dtype=np.int32)]
             for i, (_, J) in enumerate(det_indices)]).astype(jnp.int32)
        target_classes = jnp.full((B, Q), self.num_classes, jnp.int32)
        target_classes = target_classes.at[det_b, det_s].set(tgt_cls_o)
        det_tgt = target_classes[:, :, None]                     # [B, Q, 1] int32

        # ----- small slab (FIXED shape): boxes, vecs, per-batch lengths ------
        src_bx = det_boxes[det_b, det_s]
        tgt_bx = jnp.concatenate(
            [targets[i]['boxes'][np.asarray(J, dtype=np.int32)]
             for i, (_, J) in enumerate(det_indices)], axis=0)
        src_vec = rel_boxes[rel_b, rel_s]
        tgt_vec = jnp.concatenate(
            [targets[i]['rel_vecs'][np.asarray(J, dtype=np.int32)]
             for i, (_, J) in enumerate(rel_indices)], axis=0)
        n_box = int(src_bx.shape[0])
        n_rel_m = int(src_vec.shape[0])
        assert n_box <= MAX_MATCH and n_rel_m <= MAX_MATCH  # TODO(synk): tile lanes >128
        slab_rows = 16 + (-(-B // 8) * 8)
        slab = jnp.zeros((slab_rows, 128), jnp.float32)
        slab = slab.at[0:4, :n_box].set(jnp.transpose(src_bx).astype(jnp.float32))
        slab = slab.at[4:8, :n_box].set(jnp.transpose(tgt_bx).astype(jnp.float32))
        slab = slab.at[8:12, :n_rel_m].set(jnp.transpose(src_vec).astype(jnp.float32))
        slab = slab.at[12:16, :n_rel_m].set(jnp.transpose(tgt_vec).astype(jnp.float32))
        det_lens = jnp.asarray([len(t['labels']) for t in targets], jnp.float32)
        rel_lens = jnp.asarray([len(t['rel_labels']) for t in targets], jnp.float32)
        slab = slab.at[16:16 + B, 0].set(det_lens)
        slab = slab.at[16:16 + B, 1].set(rel_lens)

        # ----- focal BCE dense multi-hot target, bf16 (half the DMA bytes) ---
        tgt_rel_o = jnp.concatenate(
            [targets[i]['rel_labels'][np.asarray(J, dtype=np.int32)]
             for i, (_, J) in enumerate(rel_indices)], axis=0)
        target_rel = jnp.zeros((B, Qr, R), jnp.bfloat16)
        target_rel = target_rel.at[rel_b, rel_s].set(tgt_rel_o.astype(jnp.bfloat16))

        # ----- emb push input: matched id embeddings, FIXED pad for MXU Gram -
        id_emb_m = id_emb[det_b, det_s]                          # [M, D] native dtype
        n_emb, D = int(id_emb_m.shape[0]), int(id_emb_m.shape[1])
        assert n_emb <= EMB_MP
        Dp = max(128, -(-D // 128) * 128)
        emb_pad = jnp.zeros((EMB_MP, Dp), id_emb.dtype).at[:n_emb, :D].set(id_emb_m)
        npairs = float(max(n_emb * (n_emb - 1) // 2, 1))

        # ----- emb pull inputs (matching glue kept in plain JAX) -------------
        # TODO(synk): torch matches rel centers to det centers by exact float
        # equality and early-returns 0 on a miss; that data-dependent early
        # return has no clean in-kernel equivalent and is resolved host-side.
        target_det_centr = tgt_bx[:, :2]
        src_emb_m = src_emb[rel_b, rel_s]
        dst_emb_m = dst_emb[rel_b, rel_s]

        def first_match(pair):
            eq = target_det_centr == pair[None, :]
            return jnp.argmax(jnp.any(eq, axis=1))

        ref_src = jax.vmap(first_match)(tgt_vec[:, :2])
        ref_dst = jax.vmap(first_match)(tgt_vec[:, 2:])
        ref_id_emb = jnp.concatenate([id_emb_m[ref_src], id_emb_m[ref_dst]], axis=0)
        pred_rel_emb = jnp.concatenate([src_emb_m, dst_emb_m], axis=0)
        P = int(pred_rel_emb.shape[0])
        assert P <= PULL_PP
        pull_pair = jnp.zeros((2, PULL_PP, Dp), id_emb.dtype)
        pull_pair = pull_pair.at[0, :P, :D].set(pred_rel_emb.astype(id_emb.dtype))
        pull_pair = pull_pair.at[1, :P, :D].set(ref_id_emb.astype(id_emb.dtype))
        pull_count = float(max(P * D, 1))

        # ----- runtime normalizers -> SMEM vector (no recompile on change) ---
        scalars = jnp.array(
            [float(n_box), float(n_emb), 1.0 / num_boxes, 1.0 / num_rel,
             1.0 / npairs, 1.0 / pull_count, 1.0 / float(B), 0.0], jnp.float32)

        # ----- ONE fused Pallas call for every scalar loss -------------------
        vals = fused_set_criterion_losses(
            scalars, det_logits, det_tgt, rel_logits, target_rel,
            slab, emb_pad, pull_pair,
            num_classes=self.num_classes, eos_coef=float(self.eos_coef),
            alpha=float(self.alpha), gamma=self.gamma,
            det_neg_class=C1 - 1, rel_neg_class=0, margin=float(self.margin))

        for name, ln in _LOSS_LANE.items():
            losses[name] = vals[0, ln]

        # ----- logging metrics (plain JAX glue; not part of the loss head) ---
        matched_logits = det_logits[det_b, det_s]
        top1 = jnp.argmax(matched_logits, axis=-1)
        acc = jnp.mean((top1 == tgt_cls_o).astype(jnp.float32)) * 100.0
        losses['class_error'] = 100.0 - acc

        matched_rel = rel_logits[rel_b, rel_s]
        _, pred_topk = jax.lax.top_k(matched_rel, self.topk)
        cls_ids = jnp.arange(R)
        in_topk = jnp.any(cls_ids[None, :, None] == pred_topk[:, None, :], axis=-1)
        pos = tgt_rel_o > 0.5
        pos_cnt = jnp.sum(pos, axis=-1)
        hits = jnp.sum(pos & in_topk, axis=-1)
        acc_row = jnp.where(pos_cnt > 0,
                            hits.astype(jnp.float32) /
                            jnp.maximum(pos_cnt, 1).astype(jnp.float32),
                            0.0)
        losses['rel_class_error'] = (
            100.0 - 100.0 * jnp.sum(acc_row) / float(tgt_rel_o.shape[0]))

        return losses


# --------------------------------------------------------------------------
# Synthetic deterministic inputs + run
# --------------------------------------------------------------------------
if __name__ == "__main__":
    key = jax.random.PRNGKey(0)
    B, Q, Qr = 2, 8, 8
    C_OBJ, C_REL = 15, 24           # small stand-ins for 90 / 117 classes
    D = 8                           # id/src/dst embedding dim

    ks = jax.random.split(key, 8)
    # Model heads emit bf16 logits / embeddings (kernel upcasts); boxes stay f32.
    outputs = {
        'pred_det': {
            'pred_logits': jax.random.normal(ks[0], (B, Q, C_OBJ + 1),
                                             jnp.float32).astype(jnp.bfloat16),
            'pred_boxes': jax.nn.sigmoid(jax.random.normal(ks[1], (B, Q, 4), jnp.float32)),
            'id_emb': jax.random.normal(ks[2], (B, Q, D), jnp.float32).astype(jnp.bfloat16),
        },
        'pred_rel': {
            'pred_logits': jax.random.normal(ks[3], (B, Qr, C_REL),
                                             jnp.float32).astype(jnp.bfloat16),
            'pred_boxes': jax.nn.sigmoid(jax.random.normal(ks[4], (B, Qr, 4), jnp.float32)),
            'src_emb': jax.random.normal(ks[5], (B, Qr, D), jnp.float32).astype(jnp.bfloat16),
            'dst_emb': jax.random.normal(ks[6], (B, Qr, D), jnp.float32).astype(jnp.bfloat16),
        },
    }

    n_det = [3, 2]
    n_rel = [2, 2]
    targets = []
    for b in range(B):
        nd, nr = n_det[b], n_rel[b]
        kb = jax.random.fold_in(ks[7], b)
        labels = jax.random.randint(jax.random.fold_in(kb, 0), (nd,), 0, C_OBJ)
        boxes = jax.nn.sigmoid(
            jax.random.normal(jax.random.fold_in(kb, 1), (nd, 4), jnp.float32))
        rel_idx = jax.random.randint(jax.random.fold_in(kb, 2), (nr, 2), 0, C_REL)
        rel_labels = jnp.zeros((nr, C_REL), jnp.float32).at[
            jnp.arange(nr)[:, None], rel_idx].set(1.0)
        sub = np.arange(nr) % nd
        obj = (np.arange(nr) + 1) % nd
        # interaction vectors = [subject center, object center] from GT box
        # centers so the emb_pull equality-matching has exact hits.
        rel_vecs = jnp.concatenate([boxes[sub, :2], boxes[obj, :2]], axis=1)
        targets.append({'labels': labels, 'boxes': boxes,
                        'rel_labels': rel_labels, 'rel_vecs': rel_vecs})

    # Deterministic stand-in for the Hungarian matcher: identity assignment.
    indices_dict = {
        'det': [(np.arange(n_det[b]), np.arange(n_det[b])) for b in range(B)],
        'rel': [(np.arange(n_rel[b]), np.arange(n_rel[b])) for b in range(B)],
    }

    criterion = SetCriterionPallas(num_classes=C_OBJ, rel_classes=C_REL, eos_coef=0.1)
    losses = criterion.forward(outputs, targets, indices_dict)
    losses = jax.tree_util.tree_map(jax.block_until_ready, losses)
    print("KERNEL_OK")
</pallas_src>

<mosaic_0001>
module attributes {stable_mosaic.version = 11 : i64} {
  func.func @_fused_loss_kernel(%arg0: memref<8xf32, #tpu.memory_space<smem>>, %arg1: memref<2x8x16xbf16, #tpu.memory_space<vmem>>, %arg2: memref<2x8x1xi32, #tpu.memory_space<vmem>>, %arg3: memref<2x8x24xbf16, #tpu.memory_space<vmem>>, %arg4: memref<2x8x24xbf16, #tpu.memory_space<vmem>>, %arg5: memref<24x128xf32, #tpu.memory_space<vmem>>, %arg6: memref<128x128xbf16, #tpu.memory_space<vmem>>, %arg7: memref<2x256x128xbf16, #tpu.memory_space<vmem>>, %arg8: memref<1x128xf32, #tpu.memory_space<vmem>>) attributes {dimension_semantics = [], scalar_prefetch = 0 : i64, scratch_operands = 0 : i64, tpu.core_type = #tpu.core_type<tc>} {
    %c0 = arith.constant 0 : index
    %0 = memref.load %arg0[%c0] : memref<8xf32, #tpu.memory_space<smem>>
    %c1 = arith.constant 1 : index
    %1 = memref.load %arg0[%c1] : memref<8xf32, #tpu.memory_space<smem>>
    %c2 = arith.constant 2 : index
    %2 = memref.load %arg0[%c2] : memref<8xf32, #tpu.memory_space<smem>>
    %c3 = arith.constant 3 : index
    %3 = memref.load %arg0[%c3] : memref<8xf32, #tpu.memory_space<smem>>
    %c4 = arith.constant 4 : index
    %4 = memref.load %arg0[%c4] : memref<8xf32, #tpu.memory_space<smem>>
    %c5 = arith.constant 5 : index
    %5 = memref.load %arg0[%c5] : memref<8xf32, #tpu.memory_space<smem>>
    %c6 = arith.constant 6 : index
    %6 = memref.load %arg0[%c6] : memref<8xf32, #tpu.memory_space<smem>>
    %c0_0 = arith.constant 0 : index
    %c0_1 = arith.constant 0 : index
    %c0_2 = arith.constant 0 : index
    %7 = vector.load %arg1[%c0_0, %c0_1, %c0_2] : memref<2x8x16xbf16, #tpu.memory_space<vmem>>, vector<2x8x16xbf16>
    %8 = arith.extf %7 : vector<2x8x16xbf16> to vector<2x8x16xf32>
    %c0_3 = arith.constant 0 : index
    %c0_4 = arith.constant 0 : index
    %c0_5 = arith.constant 0 : index
    %9 = vector.load %arg2[%c0_3, %c0_4, %c0_5] : memref<2x8x1xi32, #tpu.memory_space<vmem>>, vector<2x8x1xi32>
    %10 = tpu.iota {dimensions = array<i32: 2>} : vector<1x1x16xi32>
    %cst = arith.constant dense<0xFF800000> : vector<2x8xf32>
    %11 = vector.multi_reduction <maximumf>, %8, %cst [2] : vector<2x8x16xf32> to vector<2x8xf32>
    %12 = vector.shape_cast %11 : vector<2x8xf32> to vector<2x8x1xf32>
    %13 = vector.broadcast %12 : vector<2x8x1xf32> to vector<2x8x16xf32>
    %14 = arith.subf %8, %13 : vector<2x8x16xf32>
    %15 = math.exp %14 : vector<2x8x16xf32>
    %cst_6 = arith.constant dense<0.000000e+00> : vector<2x8xf32>
    %16 = vector.multi_reduction <add>, %15, %cst_6 [2] : vector<2x8x16xf32> to vector<2x8xf32>
    %17 = vector.shape_cast %16 : vector<2x8xf32> to vector<2x8x1xf32>
    %18 = math.log %17 : vector<2x8x1xf32>
    %19 = arith.addf %18, %12 : vector<2x8x1xf32>
    %20 = vector.broadcast %10 : vector<1x1x16xi32> to vector<2x8x16xi32>
    %21 = vector.broadcast %9 : vector<2x8x1xi32> to vector<2x8x16xi32>
    %22 = arith.cmpi eq, %20, %21 : vector<2x8x16xi32>
    %cst_7 = arith.constant 0.000000e+00 : f32
    %23 = vector.broadcast %cst_7 : f32 to vector<2x8x16xf32>
    %24 = arith.select %22, %8, %23 : vector<2x8x16xi1>, vector<2x8x16xf32>
    %cst_8 = arith.constant dense<0.000000e+00> : vector<2x8xf32>
    %25 = vector.multi_reduction <add>, %24, %cst_8 [2] : vector<2x8x16xf32> to vector<2x8xf32>
    %26 = vector.shape_cast %25 : vector<2x8xf32> to vector<2x8x1xf32>
    %27 = arith.subf %19, %26 : vector<2x8x1xf32>
    %c15_i32 = arith.constant 15 : i32
    %28 = vector.broadcast %c15_i32 : i32 to vector<2x8x1xi32>
    %29 = arith.cmpi eq, %9, %28 : vector<2x8x1xi32>
    %cst_9 = arith.constant 1.000000e-01 : f32
    %cst_10 = arith.constant 1.000000e+00 : f32
    %30 = vector.broadcast %cst_9 : f32 to vector<2x8x1xf32>
    %31 = vector.broadcast %cst_10 : f32 to vector<2x8x1xf32>
    %32 = arith.select %29, %30, %31 : vector<2x8x1xi1>, vector<2x8x1xf32>
    %33 = arith.mulf %32, %27 : vector<2x8x1xf32>
    %34 = vector.shape_cast %33 : vector<2x8x1xf32> to vector<1x2x8x1xf32>
    %cst_11 = arith.constant dense<0.000000e+00> : vector<1xf32>
    %35 = vector.multi_reduction <add>, %34, %cst_11 [1, 2, 3] : vector<1x2x8x1xf32> to vector<1xf32>
    %36 = vector.shape_cast %35 : vector<1xf32> to vector<1x1x1x1xf32>
    %37 = vector.extract %36[0, 0, 0, 0] : f32 from vector<1x1x1x1xf32>
    %38 = vector.shape_cast %32 : vector<2x8x1xf32> to vector<1x2x8x1xf32>
    %cst_12 = arith.constant dense<0.000000e+00> : vector<1xf32>
    %39 = vector.multi_reduction <add>, %38, %cst_12 [1, 2, 3] : vector<1x2x8x1xf32> to vector<1xf32>
    %40 = vector.shape_cast %39 : vector<1xf32> to vector<1x1x1x1xf32>
    %41 = vector.extract %40[0, 0, 0, 0] : f32 from vector<1x1x1x1xf32>
    %42 = arith.divf %37, %41 : f32
    %c0_13 = arith.constant 0 : index
    %c0_14 = arith.constant 0 : index
    %43 = vector.load %arg5[%c0_13, %c0_14] : memref<24x128xf32, #tpu.memory_space<vmem>>, vector<24x128xf32>
    %44 = vector.extract_strided_slice %43 {offsets = [16, 0], sizes = [2, 1], strides = [1, 1]} : vector<24x128xf32> to vector<2x1xf32>
    %45 = vector.extract_strided_slice %43 {offsets = [16, 1], sizes = [2, 1], strides = [1, 1]} : vector<24x128xf32> to vector<2x1xf32>
    %46 = tpu.iota {dimensions = array<i32: 2>} : vector<1x1x16xi32>
    %c15_i32_15 = arith.constant 15 : i32
    %47 = vector.broadcast %c15_i32_15 : i32 to vector<1x1x16xi32>
    %48 = arith.cmpi eq, %46, %47 : vector<1x1x16xi32>
    %cst_16 = arith.constant -3.000000e+38 : f32
    %49 = vector.shape_cast %48 : vector<1x1x16xi1> to vector<1x1x16xi1>
    %50 = vector.broadcast %49 : vector<1x1x16xi1> to vector<2x8x16xi1>
    %51 = vector.broadcast %cst_16 : f32 to vector<2x8x16xf32>
    %52 = arith.select %50, %51, %8 : vector<2x8x16xi1>, vector<2x8x16xf32>
    %cst_17 = arith.constant dense<0xFF800000> : vector<2x8xf32>
    %53 = vector.multi_reduction <maximumf>, %52, %cst_17 [2] : vector<2x8x16xf32> to vector<2x8xf32>
    %cst_18 = arith.constant 0.000000e+00 : f32
    %54 = vector.shape_cast %48 : vector<1x1x16xi1> to vector<1x1x16xi1>
    %55 = vector.broadcast %54 : vector<1x1x16xi1> to vector<2x8x16xi1>
    %56 = vector.broadcast %cst_18 : f32 to vector<2x8x16xf32>
    %57 = arith.select %55, %8, %56 : vector<2x8x16xi1>, vector<2x8x16xf32>
    %cst_19 = arith.constant dense<0.000000e+00> : vector<2x8xf32>
    %58 = vector.multi_reduction <add>, %57, %cst_19 [2] : vector<2x8x16xf32> to vector<2x8xf32>
    %59 = arith.cmpf oge, %53, %58 : vector<2x8xf32>
    %60 = arith.extui %59 : vector<2x8xi1> to vector<2x8xi32>
    %61 = arith.sitofp %60 : vector<2x8xi32> to vector<2x8xf32>
    %cst_20 = arith.constant dense<0.000000e+00> : vector<2xf32>
    %62 = vector.multi_reduction <add>, %61, %cst_20 [1] : vector<2x8xf32> to vector<2xf32>
    %63 = vector.shape_cast %62 : vector<2xf32> to vector<2x1xf32>
    %64 = arith.subf %63, %44 : vector<2x1xf32>
    %65 = math.absf %64 : vector<2x1xf32>
    %66 = vector.shape_cast %65 : vector<2x1xf32> to vector<1x2x1xf32>
    %cst_21 = arith.constant dense<0.000000e+00> : vector<1xf32>
    %67 = vector.multi_reduction <add>, %66, %cst_21 [1, 2] : vector<1x2x1xf32> to vector<1xf32>
    %68 = vector.shape_cast %67 : vector<1xf32> to vector<1x1x1xf32>
    %69 = vector.extract %68[0, 0, 0] : f32 from vector<1x1x1xf32>
    %70 = arith.mulf %69, %6 : f32
    %c0_22 = arith.constant 0 : index
    %c0_23 = arith.constant 0 : index
    %c0_24 = arith.constant 0 : index
    %71 = vector.load %arg3[%c0_22, %c0_23, %c0_24] : memref<2x8x24xbf16, #tpu.memory_space<vmem>>, vector<2x8x24xbf16>
    %72 = arith.extf %71 : vector<2x8x24xbf16> to vector<2x8x24xf32>
    %c0_25 = arith.constant 0 : index
    %c0_26 = arith.constant 0 : index
    %c0_27 = arith.constant 0 : index
    %73 = vector.load %arg4[%c0_25, %c0_26, %c0_27] : memref<2x8x24xbf16, #tpu.memory_space<vmem>>, vector<2x8x24xbf16>
    %74 = arith.extf %73 : vector<2x8x24xbf16> to vector<2x8x24xf32>
    %75 = math.absf %72 : vector<2x8x24xf32>
    %cst_28 = arith.constant 0.000000e+00 : f32
    %76 = vector.broadcast %cst_28 : f32 to vector<2x8x24xf32>
    %77 = arith.subf %76, %75 : vector<2x8x24xf32>
    %78 = math.exp %77 : vector<2x8x24xf32>
    %cst_29 = arith.constant 1.000000e+00 : f32
    %79 = vector.broadcast %cst_29 : f32 to vector<2x8x24xf32>
    %80 = arith.addf %79, %78 : vector<2x8x24xf32>
    %cst_30 = arith.constant 1.000000e+00 : f32
    %81 = vector.broadcast %cst_30 : f32 to vector<2x8x24xf32>
    %82 = arith.divf %81, %80 : vector<2x8x24xf32>
    %cst_31 = arith.constant 0.000000e+00 : f32
    %83 = vector.broadcast %cst_31 : f32 to vector<2x8x24xf32>
    %84 = arith.cmpf oge, %72, %83 : vector<2x8x24xf32>
    %85 = arith.mulf %78, %82 : vector<2x8x24xf32>
    %86 = arith.select %84, %82, %85 : vector<2x8x24xi1>, vector<2x8x24xf32>
    %cst_32 = arith.constant 1.000000e+00 : f32
    %87 = vector.broadcast %cst_32 : f32 to vector<2x8x24xf32>
    %88 = arith.subf %87, %86 : vector<2x8x24xf32>
    %89 = arith.mulf %88, %74 : vector<2x8x24xf32>
    %cst_33 = arith.constant 1.000000e+00 : f32
    %90 = vector.broadcast %cst_33 : f32 to vector<2x8x24xf32>
    %91 = arith.subf %90, %74 : vector<2x8x24xf32>
    %92 = arith.mulf %86, %91 : vector<2x8x24xf32>
    %93 = arith.addf %89, %92 : vector<2x8x24xf32>
    %94 = arith.mulf %93, %93 : vector<2x8x24xf32>
    %cst_34 = arith.constant 2.500000e-01 : f32
    %95 = vector.broadcast %cst_34 : f32 to vector<2x8x24xf32>
    %96 = arith.mulf %95, %74 : vector<2x8x24xf32>
    %cst_35 = arith.constant 1.000000e+00 : f32
    %97 = vector.broadcast %cst_35 : f32 to vector<2x8x24xf32>
    %98 = arith.subf %97, %74 : vector<2x8x24xf32>
    %cst_36 = arith.constant 7.500000e-01 : f32
    %99 = vector.broadcast %cst_36 : f32 to vector<2x8x24xf32>
    %100 = arith.mulf %99, %98 : vector<2x8x24xf32>
    %101 = arith.addf %96, %100 : vector<2x8x24xf32>
    %102 = arith.mulf %101, %94 : vector<2x8x24xf32>
    %cst_37 = arith.constant 0.000000e+00 : f32
    %103 = vector.broadcast %cst_37 : f32 to vector<2x8x24xf32>
    %104 = arith.maximumf %72, %103 : vector<2x8x24xf32>
    %105 = arith.mulf %72, %74 : vector<2x8x24xf32>
    %106 = arith.subf %104, %105 : vector<2x8x24xf32>
    %cst_38 = arith.constant 1.000000e+00 : f32
    %107 = vector.broadcast %cst_38 : f32 to vector<2x8x24xf32>
    %108 = arith.addf %107, %78 : vector<2x8x24xf32>
    %109 = math.log %108 : vector<2x8x24xf32>
    %110 = arith.addf %106, %109 : vector<2x8x24xf32>
    %111 = arith.mulf %110, %102 : vector<2x8x24xf32>
    %112 = vector.shape_cast %111 : vector<2x8x24xf32> to vector<1x2x8x24xf32>
    %cst_39 = arith.constant dense<0.000000e+00> : vector<1xf32>
    %113 = vector.multi_reduction <add>, %112, %cst_39 [1, 2, 3] : vector<1x2x8x24xf32> to vector<1xf32>
    %114 = vector.shape_cast %113 : vector<1xf32> to vector<1x1x1x1xf32>
    %115 = vector.extract %114[0, 0, 0, 0] : f32 from vector<1x1x1x1xf32>
    %116 = tpu.iota {dimensions = array<i32: 2>} : vector<1x1x24xi32>
    %c0_i32 = arith.constant 0 : i32
    %117 = vector.broadcast %c0_i32 : i32 to vector<1x1x24xi32>
    %118 = arith.cmpi eq, %116, %117 : vector<1x1x24xi32>
    %cst_40 = arith.constant -3.000000e+38 : f32
    %119 = vector.shape_cast %118 : vector<1x1x24xi1> to vector<1x1x24xi1>
    %120 = vector.broadcast %119 : vector<1x1x24xi1> to vector<2x8x24xi1>
    %121 = vector.broadcast %cst_40 : f32 to vector<2x8x24xf32>
    %122 = arith.select %120, %121, %72 : vector<2x8x24xi1>, vector<2x8x24xf32>
    %cst_41 = arith.constant dense<0xFF800000> : vector<2x8xf32>
    %123 = vector.multi_reduction <maximumf>, %122, %cst_41 [2] : vector<2x8x24xf32> to vector<2x8xf32>
    %cst_42 = arith.constant 0.000000e+00 : f32
    %124 = vector.shape_cast %118 : vector<1x1x24xi1> to vector<1x1x24xi1>
    %125 = vector.broadcast %124 : vector<1x1x24xi1> to vector<2x8x24xi1>
    %126 = vector.broadcast %cst_42 : f32 to vector<2x8x24xf32>
    %127 = arith.select %125, %72, %126 : vector<2x8x24xi1>, vector<2x8x24xf32>
    %cst_43 = arith.constant dense<0.000000e+00> : vector<2x8xf32>
    %128 = vector.multi_reduction <add>, %127, %cst_43 [2] : vector<2x8x24xf32> to vector<2x8xf32>
    %129 = arith.cmpf ogt, %123, %128 : vector<2x8xf32>
    %130 = arith.extui %129 : vector<2x8xi1> to vector<2x8xi32>
    %131 = arith.sitofp %130 : vector<2x8xi32> to vector<2x8xf32>
    %cst_44 = arith.constant dense<0.000000e+00> : vector<2xf32>
    %132 = vector.multi_reduction <add>, %131, %cst_44 [1] : vector<2x8xf32> to vector<2xf32>
    %133 = vector.shape_cast %132 : vector<2xf32> to vector<2x1xf32>
    %134 = arith.subf %133, %45 : vector<2x1xf32>
    %135 = math.absf %134 : vector<2x1xf32>
    %136 = vector.shape_cast %135 : vector<2x1xf32> to vector<1x2x1xf32>
    %cst_45 = arith.constant dense<0.000000e+00> : vector<1xf32>
    %137 = vector.multi_reduction <add>, %136, %cst_45 [1, 2] : vector<1x2x1xf32> to vector<1xf32>
    %138 = vector.shape_cast %137 : vector<1xf32> to vector<1x1x1xf32>
    %139 = vector.extract %138[0, 0, 0] : f32 from vector<1x1x1xf32>
    %140 = arith.mulf %139, %6 : f32
    %141 = tpu.iota {dimensions = array<i32: 1>} : vector<1x128xi32>
    %142 = arith.sitofp %141 : vector<1x128xi32> to vector<1x128xf32>
    %143 = vector.extract_strided_slice %43 {offsets = [0, 0], sizes = [8, 128], strides = [1, 1]} : vector<24x128xf32> to vector<8x128xf32>
    %144 = vector.extract_strided_slice %143 {offsets = [0, 0], sizes = [4, 128], strides = [1, 1]} : vector<8x128xf32> to vector<4x128xf32>
    %145 = vector.extract_strided_slice %143 {offsets = [4, 0], sizes = [4, 128], strides = [1, 1]} : vector<8x128xf32> to vector<4x128xf32>
    %146 = arith.subf %144, %145 : vector<4x128xf32>
    %147 = math.absf %146 : vector<4x128xf32>
    %148 = vector.shape_cast %147 : vector<4x128xf32> to vector<1x4x128xf32>
    %cst_46 = arith.constant dense<0.000000e+00> : vector<1xf32>
    %149 = vector.multi_reduction <add>, %148, %cst_46 [1, 2] : vector<1x4x128xf32> to vector<1xf32>
    %150 = vector.shape_cast %149 : vector<1xf32> to vector<1x1x1xf32>
    %151 = vector.extract %150[0, 0, 0] : f32 from vector<1x1x1xf32>
    %152 = arith.mulf %151, %2 : f32
    %153 = vector.extract_strided_slice %143 {offsets = [0, 0], sizes = [1, 128], strides = [1, 1]} : vector<8x128xf32> to vector<1x128xf32>
    %154 = vector.extract_strided_slice %143 {offsets = [1, 0], sizes = [1, 128], strides = [1, 1]} : vector<8x128xf32> to vector<1x128xf32>
    %155 = vector.extract_strided_slice %143 {offsets = [2, 0], sizes = [1, 128], strides = [1, 1]} : vector<8x128xf32> to vector<1x128xf32>
    %156 = vector.extract_strided_slice %143 {offsets = [3, 0], sizes = [1, 128], strides = [1, 1]} : vector<8x128xf32> to vector<1x128xf32>
    %157 = vector.extract_strided_slice %143 {offsets = [4, 0], sizes = [1, 128], strides = [1, 1]} : vector<8x128xf32> to vector<1x128xf32>
    %158 = vector.extract_strided_slice %143 {offsets = [5, 0], sizes = [1, 128], strides = [1, 1]} : vector<8x128xf32> to vector<1x128xf32>
    %159 = vector.extract_strided_slice %143 {offsets = [6, 0], sizes = [1, 128], strides = [1, 1]} : vector<8x128xf32> to vector<1x128xf32>
    %160 = vector.extract_strided_slice %143 {offsets = [7, 0], sizes = [1, 128], strides = [1, 1]} : vector<8x128xf32> to vector<1x128xf32>
    %cst_47 = arith.constant 5.000000e-01 : f32
    %161 = vector.broadcast %cst_47 : f32 to vector<1x128xf32>
    %162 = arith.mulf %161, %155 : vector<1x128xf32>
    %163 = arith.subf %153, %162 : vector<1x128xf32>
    %cst_48 = arith.constant 5.000000e-01 : f32
    %164 = vector.broadcast %cst_48 : f32 to vector<1x128xf32>
    %165 = arith.mulf %164, %156 : vector<1x128xf32>
    %166 = arith.subf %154, %165 : vector<1x128xf32>
    %cst_49 = arith.constant 5.000000e-01 : f32
    %167 = vector.broadcast %cst_49 : f32 to vector<1x128xf32>
    %168 = arith.mulf %167, %155 : vector<1x128xf32>
    %169 = arith.addf %153, %168 : vector<1x128xf32>
    %cst_50 = arith.constant 5.000000e-01 : f32
    %170 = vector.broadcast %cst_50 : f32 to vector<1x128xf32>
    %171 = arith.mulf %170, %156 : vector<1x128xf32>
    %172 = arith.addf %154, %171 : vector<1x128xf32>
    %cst_51 = arith.constant 5.000000e-01 : f32
    %173 = vector.broadcast %cst_51 : f32 to vector<1x128xf32>
    %174 = arith.mulf %173, %159 : vector<1x128xf32>
    %175 = arith.subf %157, %174 : vector<1x128xf32>
    %cst_52 = arith.constant 5.000000e-01 : f32
    %176 = vector.broadcast %cst_52 : f32 to vector<1x128xf32>
    %177 = arith.mulf %176, %160 : vector<1x128xf32>
    %178 = arith.subf %158, %177 : vector<1x128xf32>
    %cst_53 = arith.constant 5.000000e-01 : f32
    %179 = vector.broadcast %cst_53 : f32 to vector<1x128xf32>
    %180 = arith.mulf %179, %159 : vector<1x128xf32>
    %181 = arith.addf %157, %180 : vector<1x128xf32>
    %cst_54 = arith.constant 5.000000e-01 : f32
    %182 = vector.broadcast %cst_54 : f32 to vector<1x128xf32>
    %183 = arith.mulf %182, %160 : vector<1x128xf32>
    %184 = arith.addf %158, %183 : vector<1x128xf32>
    %185 = arith.subf %169, %163 : vector<1x128xf32>
    %186 = arith.subf %172, %166 : vector<1x128xf32>
    %187 = arith.mulf %185, %186 : vector<1x128xf32>
    %188 = arith.subf %181, %175 : vector<1x128xf32>
    %189 = arith.subf %184, %178 : vector<1x128xf32>
    %190 = arith.mulf %188, %189 : vector<1x128xf32>
    %191 = arith.minimumf %169, %181 : vector<1x128xf32>
    %192 = arith.maximumf %163, %175 : vector<1x128xf32>
    %193 = arith.subf %191, %192 : vector<1x128xf32>
    %cst_55 = arith.constant 0.000000e+00 : f32
    %194 = vector.broadcast %cst_55 : f32 to vector<1x128xf32>
    %195 = arith.maximumf %193, %194 : vector<1x128xf32>
    %196 = arith.minimumf %172, %184 : vector<1x128xf32>
    %197 = arith.maximumf %166, %178 : vector<1x128xf32>
    %198 = arith.subf %196, %197 : vector<1x128xf32>
    %cst_56 = arith.constant 0.000000e+00 : f32
    %199 = vector.broadcast %cst_56 : f32 to vector<1x128xf32>
    %200 = arith.maximumf %198, %199 : vector<1x128xf32>
    %201 = arith.mulf %195, %200 : vector<1x128xf32>
    %202 = arith.addf %187, %190 : vector<1x128xf32>
    %203 = arith.subf %202, %201 : vector<1x128xf32>
    %cst_57 = arith.constant 1.000000e-07 : f32
    %204 = vector.broadcast %cst_57 : f32 to vector<1x128xf32>
    %205 = arith.addf %203, %204 : vector<1x128xf32>
    %206 = arith.divf %201, %205 : vector<1x128xf32>
    %207 = arith.maximumf %169, %181 : vector<1x128xf32>
    %208 = arith.minimumf %163, %175 : vector<1x128xf32>
    %209 = arith.subf %207, %208 : vector<1x128xf32>
    %210 = arith.maximumf %172, %184 : vector<1x128xf32>
    %211 = arith.minimumf %166, %178 : vector<1x128xf32>
    %212 = arith.subf %210, %211 : vector<1x128xf32>
    %213 = arith.mulf %209, %212 : vector<1x128xf32>
    %214 = arith.subf %213, %203 : vector<1x128xf32>
    %cst_58 = arith.constant 1.000000e-07 : f32
    %215 = vector.broadcast %cst_58 : f32 to vector<1x128xf32>
    %216 = arith.addf %213, %215 : vector<1x128xf32>
    %217 = arith.divf %214, %216 : vector<1x128xf32>
    %218 = arith.subf %206, %217 : vector<1x128xf32>
    %219 = vector.broadcast %0 : f32 to vector<1x128xf32>
    %220 = arith.cmpf olt, %142, %219 : vector<1x128xf32>
    %cst_59 = arith.constant 1.000000e+00 : f32
    %221 = vector.broadcast %cst_59 : f32 to vector<1x128xf32>
    %222 = arith.subf %221, %218 : vector<1x128xf32>
    %cst_60 = arith.constant 0.000000e+00 : f32
    %223 = vector.broadcast %cst_60 : f32 to vector<1x128xf32>
    %224 = arith.select %220, %222, %223 : vector<1x128xi1>, vector<1x128xf32>
    %225 = vector.shape_cast %224 : vector<1x128xf32> to vector<1x1x128xf32>
    %cst_61 = arith.constant dense<0.000000e+00> : vector<1xf32>
    %226 = vector.multi_reduction <add>, %225, %cst_61 [1, 2] : vector<1x1x128xf32> to vector<1xf32>
    %227 = vector.shape_cast %226 : vector<1xf32> to vector<1x1x1xf32>
    %228 = vector.extract %227[0, 0, 0] : f32 from vector<1x1x1xf32>
    %229 = arith.mulf %228, %2 : f32
    %230 = vector.extract_strided_slice %43 {offsets = [8, 0], sizes = [8, 128], strides = [1, 1]} : vector<24x128xf32> to vector<8x128xf32>
    %231 = vector.extract_strided_slice %230 {offsets = [0, 0], sizes = [4, 128], strides = [1, 1]} : vector<8x128xf32> to vector<4x128xf32>
    %232 = vector.extract_strided_slice %230 {offsets = [4, 0], sizes = [4, 128], strides = [1, 1]} : vector<8x128xf32> to vector<4x128xf32>
    %233 = arith.subf %231, %232 : vector<4x128xf32>
    %234 = math.absf %233 : vector<4x128xf32>
    %235 = vector.shape_cast %234 : vector<4x128xf32> to vector<1x4x128xf32>
    %cst_62 = arith.constant dense<0.000000e+00> : vector<1xf32>
    %236 = vector.multi_reduction <add>, %235, %cst_62 [1, 2] : vector<1x4x128xf32> to vector<1xf32>
    %237 = vector.shape_cast %236 : vector<1xf32> to vector<1x1x1xf32>
    %238 = vector.extract %237[0, 0, 0] : f32 from vector<1x1x1xf32>
    %239 = arith.mulf %238, %3 : f32
    %c0_63 = arith.constant 0 : index
    %c0_64 = arith.constant 0 : index
    %240 = vector.load %arg6[%c0_63, %c0_64] : memref<128x128xbf16, #tpu.memory_space<vmem>>, vector<128x128xbf16>
    %241 = arith.extf %240 : vector<128x128xbf16> to vector<128x128xf32>
    %cst_65 = arith.constant dense<0.000000e+00> : vector<128x128xf32>
    %242 = tpu.matmul %241, %241, %cst_65 {dimension_numbers = #tpu.dot_dimension_numbers<[1], [1], [0], [0], [0, 0, 1, 0], [], []>} : vector<128x128xf32>, vector<128x128xf32>, vector<128x128xf32> -> vector<128x128xf32>
    %243 = arith.mulf %241, %241 : vector<128x128xf32>
    %cst_66 = arith.constant dense<0.000000e+00> : vector<128xf32>
    %244 = vector.multi_reduction <add>, %243, %cst_66 [1] : vector<128x128xf32> to vector<128xf32>
    %245 = vector.shape_cast %244 : vector<128xf32> to vector<128x1xf32>
    %246 = tpu.transpose %245, [1, 0] : vector<128x1xf32> -> vector<1x128xf32>
    %247 = vector.broadcast %245 : vector<128x1xf32> to vector<128x128xf32>
    %248 = vector.broadcast %246 : vector<1x128xf32> to vector<128x128xf32>
    %249 = arith.addf %247, %248 : vector<128x128xf32>
    %cst_67 = arith.constant 2.000000e+00 : f32
    %250 = vector.broadcast %cst_67 : f32 to vector<128x128xf32>
    %251 = arith.mulf %250, %242 : vector<128x128xf32>
    %252 = arith.subf %249, %251 : vector<128x128xf32>
    %cst_68 = arith.constant 0.000000e+00 : f32
    %253 = vector.broadcast %cst_68 : f32 to vector<128x128xf32>
    %254 = arith.maximumf %252, %253 : vector<128x128xf32>
    %cst_69 = arith.constant 9.99999996E-13 : f32
    %255 = vector.broadcast %cst_69 : f32 to vector<128x128xf32>
    %256 = arith.addf %254, %255 : vector<128x128xf32>
    %257 = math.sqrt %256 : vector<128x128xf32>
    %cst_70 = arith.constant 8.000000e+00 : f32
    %258 = vector.broadcast %cst_70 : f32 to vector<128x128xf32>
    %259 = arith.subf %258, %257 : vector<128x128xf32>
    %cst_71 = arith.constant 0.000000e+00 : f32
    %260 = vector.broadcast %cst_71 : f32 to vector<128x128xf32>
    %261 = arith.maximumf %259, %260 : vector<128x128xf32>
    %262 = tpu.iota {dimensions = array<i32: 0>} : vector<128x1xi32>
    %263 = arith.sitofp %262 : vector<128x1xi32> to vector<128x1xf32>
    %264 = tpu.iota {dimensions = array<i32: 1>} : vector<1x128xi32>
    %265 = arith.sitofp %264 : vector<1x128xi32> to vector<1x128xf32>
    %266 = vector.broadcast %265 : vector<1x128xf32> to vector<128x128xf32>
    %267 = vector.broadcast %263 : vector<128x1xf32> to vector<128x128xf32>
    %268 = arith.cmpf olt, %266, %267 : vector<128x128xf32>
    %269 = vector.broadcast %1 : f32 to vector<128x1xf32>
    %270 = arith.cmpf olt, %263, %269 : vector<128x1xf32>
    %271 = vector.broadcast %270 : vector<128x1xi1> to vector<128x128xi1>
    %272 = arith.andi %268, %271 : vector<128x128xi1>
    %273 = vector.broadcast %1 : f32 to vector<1x128xf32>
    %274 = arith.cmpf olt, %265, %273 : vector<1x128xf32>
    %275 = vector.broadcast %274 : vector<1x128xi1> to vector<128x128xi1>
    %276 = arith.andi %272, %275 : vector<128x128xi1>
    %277 = arith.mulf %261, %261 : vector<128x128xf32>
    %cst_72 = arith.constant 0.000000e+00 : f32
    %278 = vector.broadcast %cst_72 : f32 to vector<128x128xf32>
    %279 = arith.select %276, %277, %278 : vector<128x128xi1>, vector<128x128xf32>
    %280 = vector.shape_cast %279 : vector<128x128xf32> to vector<1x128x128xf32>
    %cst_73 = arith.constant dense<0.000000e+00> : vector<1xf32>
    %281 = vector.multi_reduction <add>, %280, %cst_73 [1, 2] : vector<1x128x128xf32> to vector<1xf32>
    %282 = vector.shape_cast %281 : vector<1xf32> to vector<1x1x1xf32>
    %283 = vector.extract %282[0, 0, 0] : f32 from vector<1x1x1xf32>
    %284 = arith.mulf %283, %4 : f32
    %c0_74 = arith.constant 0 : index
    %c0_75 = arith.constant 0 : index
    %c0_76 = arith.constant 0 : index
    %285 = vector.load %arg7[%c0_74, %c0_75, %c0_76] : memref<2x256x128xbf16, #tpu.memory_space<vmem>>, vector<2x256x128xbf16>
    %286 = arith.extf %285 : vector<2x256x128xbf16> to vector<2x256x128xf32>
    %287 = vector.extract_strided_slice %286 {offsets = [0, 0, 0], sizes = [1, 256, 128], strides = [1, 1, 1]} : vector<2x256x128xf32> to vector<1x256x128xf32>
    %288 = vector.shape_cast %287 : vector<1x256x128xf32> to vector<256x128xf32>
    %289 = vector.extract_strided_slice %286 {offsets = [1, 0, 0], sizes = [1, 256, 128], strides = [1, 1, 1]} : vector<2x256x128xf32> to vector<1x256x128xf32>
    %290 = vector.shape_cast %289 : vector<1x256x128xf32> to vector<256x128xf32>
    %291 = arith.subf %288, %290 : vector<256x128xf32>
    %292 = arith.mulf %291, %291 : vector<256x128xf32>
    %293 = vector.shape_cast %292 : vector<256x128xf32> to vector<1x256x128xf32>
    %cst_77 = arith.constant dense<0.000000e+00> : vector<1xf32>
    %294 = vector.multi_reduction <add>, %293, %cst_77 [1, 2] : vector<1x256x128xf32> to vector<1xf32>
    %295 = vector.shape_cast %294 : vector<1xf32> to vector<1x1x1xf32>
    %296 = vector.extract %295[0, 0, 0] : f32 from vector<1x1x1xf32>
    %297 = arith.mulf %296, %5 : f32
    %cst_78 = arith.constant 0.000000e+00 : f32
    %298 = vector.broadcast %cst_78 : f32 to vector<1x128xf32>
    %c0_i32_79 = arith.constant 0 : i32
    %299 = vector.broadcast %c0_i32_79 : i32 to vector<1x128xi32>
    %300 = arith.cmpi eq, %141, %299 : vector<1x128xi32>
    %301 = vector.broadcast %42 : f32 to vector<1x128xf32>
    %302 = arith.select %300, %301, %298 : vector<1x128xi1>, vector<1x128xf32>
    %c1_i32 = arith.constant 1 : i32
    %303 = vector.broadcast %c1_i32 : i32 to vector<1x128xi32>
    %304 = arith.cmpi eq, %141, %303 : vector<1x128xi32>
    %305 = vector.broadcast %70 : f32 to vector<1x128xf32>
    %306 = arith.select %304, %305, %302 : vector<1x128xi1>, vector<1x128xf32>
    %c2_i32 = arith.constant 2 : i32
    %307 = vector.broadcast %c2_i32 : i32 to vector<1x128xi32>
    %308 = arith.cmpi eq, %141, %307 : vector<1x128xi32>
    %309 = vector.broadcast %152 : f32 to vector<1x128xf32>
    %310 = arith.select %308, %309, %306 : vector<1x128xi1>, vector<1x128xf32>
    %c3_i32 = arith.constant 3 : i32
    %311 = vector.broadcast %c3_i32 : i32 to vector<1x128xi32>
    %312 = arith.cmpi eq, %141, %311 : vector<1x128xi32>
    %313 = vector.broadcast %229 : f32 to vector<1x128xf32>
    %314 = arith.select %312, %313, %310 : vector<1x128xi1>, vector<1x128xf32>
    %c4_i32 = arith.constant 4 : i32
    %315 = vector.broadcast %c4_i32 : i32 to vector<1x128xi32>
    %316 = arith.cmpi eq, %141, %315 : vector<1x128xi32>
    %317 = vector.broadcast %115 : f32 to vector<1x128xf32>
    %318 = arith.select %316, %317, %314 : vector<1x128xi1>, vector<1x128xf32>
    %c5_i32 = arith.constant 5 : i32
    %319 = vector.broadcast %c5_i32 : i32 to vector<1x128xi32>
    %320 = arith.cmpi eq, %141, %319 : vector<1x128xi32>
    %321 = vector.broadcast %140 : f32 to vector<1x128xf32>
    %322 = arith.select %320, %321, %318 : vector<1x128xi1>, vector<1x128xf32>
    %c6_i32 = arith.constant 6 : i32
    %323 = vector.broadcast %c6_i32 : i32 to vector<1x128xi32>
    %324 = arith.cmpi eq, %141, %323 : vector<1x128xi32>
    %325 = vector.broadcast %239 : f32 to vector<1x128xf32>
    %326 = arith.select %324, %325, %322 : vector<1x128xi1>, vector<1x128xf32>
    %c7_i32 = arith.constant 7 : i32
    %327 = vector.broadcast %c7_i32 : i32 to vector<1x128xi32>
    %328 = arith.cmpi eq, %141, %327 : vector<1x128xi32>
    %329 = vector.broadcast %284 : f32 to vector<1x128xf32>
    %330 = arith.select %328, %329, %326 : vector<1x128xi1>, vector<1x128xf32>
    %c8_i32 = arith.constant 8 : i32
    %331 = vector.broadcast %c8_i32 : i32 to vector<1x128xi32>
    %332 = arith.cmpi eq, %141, %331 : vector<1x128xi32>
    %333 = vector.broadcast %297 : f32 to vector<1x128xf32>
    %334 = arith.select %332, %333, %330 : vector<1x128xi1>, vector<1x128xf32>
    %c0_80 = arith.constant 0 : index
    %c0_81 = arith.constant 0 : index
    %335 = vector.load %arg8[%c0_80, %c0_81] : memref<1x128xf32, #tpu.memory_space<vmem>>, vector<1x128xf32>
    tpu.vector_store %arg8[%c0_80, %c0_81], %334 {strides = array<i32>} : memref<1x128xf32, #tpu.memory_space<vmem>>, vector<1x128xf32>,
    return
  }
}

</mosaic_0001>

<llo_original>
// kernel: tpu_custom_call.1
$region0: #{tpu_custom_call.1}
  #allocation0 [shape = 'u32[]', space=smem, size = 0x4, offset = 0x4, fixed_abs, tag = 'smem constant byte address 0x4 - core index']
  #allocation1 [shape = 'u32[144,128]{1,0:T(1,128)}', space=vmem, size = 0x12000, scoped, tag = 'internal scratch']
  %s0 = inlined_call_operand.vmem [shape: f32[8], index: 0, kind: input, shape index: {}]
  %s1 = inlined_call_operand.hbm [shape: bf16[2,8,16], index: 1, kind: input, shape index: {}]
  %s2 = inlined_call_operand.vmem [shape: s32[2,8,1], index: 2, kind: input, shape index: {}]
  %s3 = inlined_call_operand.hbm [shape: bf16[2,8,24], index: 3, kind: input, shape index: {}]
  %s4 = inlined_call_operand.hbm [shape: bf16[2,8,24], index: 4, kind: input, shape index: {}]
  %s5 = inlined_call_operand.vmem [shape: f32[24,128], index: 5, kind: input, shape index: {}]
  %s6 = inlined_call_operand.hbm [shape: bf16[128,128], index: 6, kind: input, shape index: {}]
  %s7 = inlined_call_operand.hbm [shape: bf16[2,256,128], index: 7, kind: input, shape index: {}]
  %s8 = inlined_call_operand.hbm [shape: f32[1,128], index: 8, kind: output, shape index: {}]
  %s9 = sld [smem:[#allocation0]]
  $region66: #{tpu_custom_call.1} parent=0
    _
  %s11 = ssub.s32 1, %s9
  %s12 = scalar_select 0, %s11, %s9
  $region1: #{tpu_custom_call.1} parent=0
    #allocation2 [shape = 'u8[512]{0}', space=smem, size = 0x200, scoped, tag = 'input window, operand 0, single buffered']
    #allocation3 [shape = 's32[1]{0}', space=sflag, size = 0x4, scoped, tag = 'scoped memory for tpu_custom_call.1']
    #allocation4 [shape = 's32[1]{0}', space=sflag, size = 0x4, scoped, tag = 'scoped memory for tpu_custom_call.1']
    #allocation5 [shape = 's32[1]{0}', space=sflag, size = 0x4, scoped, tag = 'scoped memory for tpu_custom_call.1']
    #allocation6 [shape = 'u8[4096]{0}', space=vmem, size = 0x1000, scoped, tag = 'input window, operand 1, single buffered']
    #allocation7 [shape = 'u8[4096]{0}', space=vmem, size = 0x1000, scoped, tag = 'input window, operand 3, single buffered']
    #allocation8 [shape = 's32[1]{0}', space=sflag, size = 0x4, scoped, tag = 'scoped memory for tpu_custom_call.1']
    #allocation9 [shape = 'u8[4096]{0}', space=vmem, size = 0x1000, scoped, tag = 'input window, operand 4, single buffered']
    #allocation10 [shape = 'u8[32768]{0}', space=vmem, size = 0x8000, scoped, tag = 'input window, operand 6, single buffered']
    #allocation11 [shape = 's32[1]{0}', space=sflag, size = 0x4, scoped, tag = 'scoped memory for tpu_custom_call.1']
    #allocation12 [shape = 'u8[131072]{0}', space=vmem, size = 0x20000, scoped, tag = 'input window, operand 7, single buffered']
    #allocation13 [shape = 'u8[512]{0}', space=vmem, size = 0x400, scoped, tag = 'output window, operand 0, single buffered']
    %13 = vsyncpa [#allocation5], 0
    %14 = vsyncpa [#allocation3], 0
    %15 = vsyncpa [#allocation8], 0
    %16 = vsyncpa [#allocation11], 0
    %17 = vsyncpa [#allocation4], 0
    // Predicated region
    $region2: #{tpu_custom_call.1} parent=1 // pred_check
      _
    $region3: #{tpu_custom_call.1} parent=1 // pred_check_branch
      %19 = sbr.rel (0) target = $region5
    $region4: #{tpu_custom_call.1} parent=1 // pred_region
      %s21 = ssub.s32 16, 16
      %22 = vsyncadd [#allocation5], %s21
      %s24 = sshll.u32 %s0, 4
      %s25 = int_to_ptr.vmem [resolvable:$true] %s24
      %27 = dma.vmem_to_smem %s25, 16, [#allocation2], [#allocation5]
    $region5: #{tpu_custom_call.1} parent=1 // pred_fallthru
      _
    // Predicated region
    $region6: #{tpu_custom_call.1} parent=1 // pred_check
      _
    $region7: #{tpu_custom_call.1} parent=1 // pred_check_branch
      %29 = sbr.rel (0) target = $region9
    $region8: #{tpu_custom_call.1} parent=1 // pred_region
      %s31 = ssub.s32 128, 128
      %32 = vsyncadd [#allocation3], %s31
      %s33 = sshll.u32 [#allocation6], 4
      %s34 = int_to_ptr.vmem [resolvable:$true] %s33
      %39 = dma.hbm_to_vmem [thread:$0]  %s1, 128, %s34, [#allocation3], 64, 64, 4
    $region9: #{tpu_custom_call.1} parent=1 // pred_fallthru
      _
    // Predicated region
    $region10: #{tpu_custom_call.1} parent=1 // pred_check
      _
    $region11: #{tpu_custom_call.1} parent=1 // pred_check_branch
      %41 = sbr.rel (0) target = $region13
    $region12: #{tpu_custom_call.1} parent=1 // pred_region
      _
    $region13: #{tpu_custom_call.1} parent=1 // pred_fallthru
      _
    // Predicated region
    $region14: #{tpu_custom_call.1} parent=1 // pred_check
      _
    $region15: #{tpu_custom_call.1} parent=1 // pred_check_branch
      %43 = sbr.rel (0) target = $region17
    $region16: #{tpu_custom_call.1} parent=1 // pred_region
      %s45 = ssub.s32 128, 128
      %46 = vsyncadd [#allocation8], %s45
      %s47 = sshll.u32 [#allocation7], 4
      %s48 = int_to_ptr.vmem [resolvable:$true] %s47
      %53 = dma.hbm_to_vmem [thread:$0]  %s3, 128, %s48, [#allocation8], 64, 64, 4
    $region17: #{tpu_custom_call.1} parent=1 // pred_fallthru
      _
    // Predicated region
    $region18: #{tpu_custom_call.1} parent=1 // pred_check
      _
    $region19: #{tpu_custom_call.1} parent=1 // pred_check_branch
      %55 = sbr.rel (0) target = $region21
    $region20: #{tpu_custom_call.1} parent=1 // pred_region
      %s57 = ssub.s32 128, 128
      %58 = vsyncadd [#allocation8], %s57
      %s59 = sshll.u32 [#allocation9], 4
      %s60 = int_to_ptr.vmem [resolvable:$true] %s59
      %65 = dma.hbm_to_vmem [thread:$0]  %s4, 128, %s60, [#allocation8], 64, 64, 4
    $region21: #{tpu_custom_call.1} parent=1 // pred_fallthru
      _
    // Predicated region
    $region22: #{tpu_custom_call.1} parent=1 // pred_check
      _
    $region23: #{tpu_custom_call.1} parent=1 // pred_check_branch
      %67 = sbr.rel (0) target = $region25
    $region24: #{tpu_custom_call.1} parent=1 // pred_region
      _
    $region25: #{tpu_custom_call.1} parent=1 // pred_fallthru
      _
    // Predicated region
    $region26: #{tpu_custom_call.1} parent=1 // pred_check
      _
    $region27: #{tpu_custom_call.1} parent=1 // pred_check_branch
      %69 = sbr.rel (0) target = $region29
    $region28: #{tpu_custom_call.1} parent=1 // pred_region
      %s71 = ssub.s32 1024, 1024
      %72 = vsyncadd [#allocation11], %s71
      %s73 = sshll.u32 [#allocation10], 4
      %s74 = int_to_ptr.vmem [resolvable:$true] %s73
      %79 = dma.hbm_to_vmem [thread:$0]  %s6, 1024, %s74, [#allocation11], 64, 64, 4
    $region29: #{tpu_custom_call.1} parent=1 // pred_fallthru
      _
    // Predicated region
    $region30: #{tpu_custom_call.1} parent=1 // pred_check
      _
    $region31: #{tpu_custom_call.1} parent=1 // pred_check_branch
      %81 = sbr.rel (0) target = $region33
    $region32: #{tpu_custom_call.1} parent=1 // pred_region
      %s83 = ssub.s32 4096, 4096
      %84 = vsyncadd [#allocation11], %s83
      %s85 = sshll.u32 [#allocation12], 4
      %s86 = int_to_ptr.vmem [resolvable:$true] %s85
      %91 = dma.hbm_to_vmem [thread:$0]  %s7, 4096, %s86, [#allocation11], 64, 64, 4
    $region33: #{tpu_custom_call.1} parent=1 // pred_fallthru
      _
    // Predicated region
    $region34: #{tpu_custom_call.1} parent=1 // pred_check
      _
    $region35: #{tpu_custom_call.1} parent=1 // pred_check_branch
      %93 = sbr.rel (0) target = $region37
    $region36: #{tpu_custom_call.1} parent=1 // pred_region
      %94 = dma.done [#allocation5], 16
    $region37: #{tpu_custom_call.1} parent=1 // pred_fallthru
      _
    // Predicated region
    $region38: #{tpu_custom_call.1} parent=1 // pred_check
      _
    $region39: #{tpu_custom_call.1} parent=1 // pred_check_branch
      %96 = sbr.rel (0) target = $region41
    $region40: #{tpu_custom_call.1} parent=1 // pred_region
      %97 = dma.done [#allocation3], 128
    $region41: #{tpu_custom_call.1} parent=1 // pred_fallthru
      _
    // Predicated region
    $region42: #{tpu_custom_call.1} parent=1 // pred_check
      _
    $region43: #{tpu_custom_call.1} parent=1 // pred_check_branch
      %99 = sbr.rel (0) target = $region45
    $region44: #{tpu_custom_call.1} parent=1 // pred_region
      %100 = dma.done [#allocation8], 128
    $region45: #{tpu_custom_call.1} parent=1 // pred_fallthru
      _
    // Predicated region
    $region46: #{tpu_custom_call.1} parent=1 // pred_check
      _
    $region47: #{tpu_custom_call.1} parent=1 // pred_check_branch
      %102 = sbr.rel (0) target = $region49
    $region48: #{tpu_custom_call.1} parent=1 // pred_region
      %103 = dma.done [#allocation8], 128
    $region49: #{tpu_custom_call.1} parent=1 // pred_fallthru
      _
    // Predicated region
    $region50: #{tpu_custom_call.1} parent=1 // pred_check
      _
    $region51: #{tpu_custom_call.1} parent=1 // pred_check_branch
      %105 = sbr.rel (0) target = $region53
    $region52: #{tpu_custom_call.1} parent=1 // pred_region
      %106 = dma.done [#allocation11], 1024
    $region53: #{tpu_custom_call.1} parent=1 // pred_fallthru
      _
    // Predicated region
    $region54: #{tpu_custom_call.1} parent=1 // pred_check
      _
    $region55: #{tpu_custom_call.1} parent=1 // pred_check_branch
      %108 = sbr.rel (0) target = $region57
    $region56: #{tpu_custom_call.1} parent=1 // pred_region
      %109 = dma.done [#allocation11], 4096
    $region57: #{tpu_custom_call.1} parent=1 // pred_fallthru
      _
    %110 = sfence
    %s111 = sld [smem:[#allocation2]]
    %s112 = sld [smem:[#allocation2 + $0x1]]
    %s113 = sld [smem:[#allocation2 + $0x2]]
    %s114 = sld [smem:[#allocation2 + $0x3]]
    %s115 = sld [smem:[#allocation2 + $0x4]]
    %s116 = sld [smem:[#allocation2 + $0x5]]
    %s117 = sld [smem:[#allocation2 + $0x6]]
    %v118 = vld [vmem:[#allocation6] sm:$0xf]
    %v119 = vld [vmem:[#allocation6 + $0x4] sm:$0xf]
    %v120 = vunpack.c.l.bf16 %v118
    %v121 = vunpack.c.l.bf16 %v119
    %v122 = vld [vmem:[%s2] sm:$0xff]
    %v123 = vld [vmem:[%s2 + $0x8] sm:$0xff]
    %v124 = vlaneseq
    %v125 = vand.u32 %v124, 127
    %vm126 = vcmask 130048
    %v127 = vsel %vm126, %v120, -inf
    %128 = vmax.xlane.f32.xlu0 %v127
    %v129 = vpop.xlane.xlu0 %128
    %v130 = vsel %vm126, %v121, -inf
    %131 = vmax.xlane.f32.xlu0 %v130
    %v132 = vpop.xlane.xlu0 %131
    %v133 = vsub.f32 %v120, %v129
    %v134 = vsub.f32 %v121, %v132
    %v135 = vmul.f32 %v133, 1.442695
    %v136 = vpow.pop %v135
    %v137 = vmul.f32 %v134, 1.442695
    %v138 = vpow.pop %v137
    %v139 = vsel %vm126, %v136, 0.0
    %140 = vadd.xlane.f32.xlu0 %v139
    %v141 = vpop.xlane.xlu0 %140
    %v142 = vsel %vm126, %v138, 0.0
    %143 = vadd.xlane.f32.xlu0 %v142
    %v144 = vpop.xlane.xlu0 %143
    %v145 = vlog2.pop %v141
    %v146 = vmul.f32 %v145, 0.6931472
    %v147 = vlog2.pop %v144
    %v148 = vmul.f32 %v147, 0.6931472
    %v149 = vadd.f32 %v146, %v129
    %v150 = vadd.f32 %v148, %v132
    %151 = vset.pattern.permute.xlu0 0
    %152 = vperm.xlu0 %151, %v122
    %v153 = vpop.permute.xlu0 %152
    %154 = vset.pattern.permute.xlu0 0
    %155 = vperm.xlu0 %154, %v123
    %v156 = vpop.permute.xlu0 %155
    %vm157 = vcmp.eq.s32.totalorder %v125, %v153
    %vm158 = vcmp.eq.s32.totalorder %v125, %v156
    %v159 = vsel %vm157, %v120, 0.0
    %v160 = vsel %vm158, %v121, 0.0
    %v161 = vsel %vm126, %v159, 0.0
    %162 = vadd.xlane.f32.xlu0 %v161
    %v163 = vpop.xlane.xlu0 %162
    %v164 = vsel %vm126, %v160, 0.0
    %165 = vadd.xlane.f32.xlu0 %v164
    %v166 = vpop.xlane.xlu0 %165
    %v167 = vsub.f32 %v149, %v163
    %v168 = vsub.f32 %v150, %v166
    %vm169 = vcmp.eq.s32.totalorder %v122, 15
    %vm170 = vcmp.eq.s32.totalorder %v123, 15
    %v171 = vsel %vm169, 0.1, 1.0
    %v172 = vsel %vm170, 0.1, 1.0
    %v173 = vmul.f32 %v171, %v167
    %v174 = vmul.f32 %v172, %v168
    %vm175 = vcmask 7168
    %v176 = vsel %vm175, %v173, 0.0
    %v177 = vsel %vm175, %v174, 0.0
    %v178 = vadd.f32 %v176, %v177
    %179 = vadd.xlane.f32.xlu0 %v178
    %v180 = vpop.xlane.xlu0 %179
    %v181 = vrot.slane %v180, 4
    %v182 = vadd.f32 %v180, %v181
    %v183 = vrot.slane %v182, 2
    %v184 = vadd.f32 %v182, %v183
    %v185 = vrot.slane %v184, 1
    %v186 = vadd.f32 %v184, %v185
    %s187 = vtos %v186
    %v188 = vsel %vm175, %v171, 0.0
    %v189 = vsel %vm175, %v172, 0.0
    %v190 = vadd.f32 %v188, %v189
    %191 = vadd.xlane.f32.xlu0 %v190
    %v192 = vpop.xlane.xlu0 %191
    %v193 = vrot.slane %v192, 4
    %v194 = vadd.f32 %v192, %v193
    %v195 = vrot.slane %v194, 2
    %v196 = vadd.f32 %v194, %v195
    %v197 = vrot.slane %v196, 1
    %v198 = vadd.f32 %v196, %v197
    %s199 = vtos %v198
    %v200 = vstv %s199
    %v201 = vrcp.pop %v200
    %s202 = vtos %v201
    %s203 = smul.f32 %s187, %s202
    %v204 = vld [vmem:[%s5] sm:$0xff]
    %v205 = vld [vmem:[%s5 + $0x8] sm:$0xff]
    %v206 = vld [vmem:[%s5 + $0x10] sm:$0xff]
    %vm207 = vcmp.eq.s32.totalorder %v125, 15
    %v208 = vsel %vm207, 1, 0
    %vm209 = vcmp.eq.s32.totalorder %v208, 1
    %v210 = vsel %vm209, -3e+38, %v120
    %v211 = vsel %vm209, -3e+38, %v121
    %v212 = vsel %vm126, %v210, -inf
    %213 = vmax.xlane.f32.xlu0 %v212
    %v214 = vpop.xlane.xlu0 %213
    %v215 = vsel %vm126, %v211, -inf
    %216 = vmax.xlane.f32.xlu0 %v215
    %v217 = vpop.xlane.xlu0 %216
    %v218 = vsel %vm209, %v120, 0.0
    %v219 = vsel %vm209, %v121, 0.0
    %v220 = vsel %vm126, %v218, 0.0
    %221 = vadd.xlane.f32.xlu0 %v220
    %v222 = vpop.xlane.xlu0 %221
    %v223 = vsel %vm126, %v219, 0.0
    %224 = vadd.xlane.f32.xlu0 %v223
    %v225 = vpop.xlane.xlu0 %224
    %vm226 = vcmp.ge.f32.partialorder %v214, %v222
    %vm227 = vcmp.ge.f32.partialorder %v217, %v225
    %v228 = vsel %vm226, 1, 0
    %v229 = vsel %vm227, 1, 0
    %v230 = vcvt.s32.f32 %v228
    %v231 = vcvt.s32.f32 %v229
    %v234 = vlaneseq
    %v235 = vshrl.u32 %v234, 7
    %v236 = vsub.s32 %v125, %v235
    %v237 = vrot.slane %v230, %v236
    %v238 = vlaneseq
    %v239 = vshrl.u32 %v238, 7
    %v240 = vsub.s32 %v125, %v239
    %v241 = vrot.slane %v231, %v240
    %vm242 = vcmask 1041409
    %v243 = vsel %vm242, %v241, %v237
    %vm245 = vcmask 58368
    %v246 = vsel %vm245, %v243, 0.0
    %247 = vadd.xlane.f32.xlu0 %v246
    %v248 = vpop.xlane.xlu0 %247
    %v249 = vsub.f32 %v248, %v206
    %v250 = vand.u32 2147483647, %v249
    %vm251 = vcmask 1024
    %v252 = vsel %vm251, %v250, 0.0
    %253 = vadd.xlane.f32.xlu0 %v252
    %v254 = vpop.xlane.xlu0 %253
    %v255 = vrot.slane %v254, 4
    %v256 = vadd.f32 %v254, %v255
    %v257 = vrot.slane %v256, 2
    %v258 = vadd.f32 %v256, %v257
    %v259 = vrot.slane %v258, 1
    %v260 = vadd.f32 %v258, %v259
    %s261 = vtos %v260
    %s262 = smul.f32 %s261, %s117
    %v263 = vld [vmem:[#allocation7] sm:$0xf]
    %v264 = vld [vmem:[#allocation7 + $0x4] sm:$0xf]
    %v265 = vunpack.c.l.bf16 %v263
    %v266 = vunpack.c.l.bf16 %v264
    %v267 = vld [vmem:[#allocation9] sm:$0xf]
    %v268 = vld [vmem:[#allocation9 + $0x4] sm:$0xf]
    %v269 = vunpack.c.l.bf16 %v267
    %v270 = vunpack.c.l.bf16 %v268
    %v271 = vand.u32 2147483647, %v265
    %v272 = vand.u32 2147483647, %v266
    %v273 = vsub.f32 0.0, %v271
    %v274 = vsub.f32 0.0, %v272
    %v275 = vmul.f32 %v273, 1.442695
    %v276 = vpow.pop %v275
    %v277 = vmul.f32 %v274, 1.442695
    %v278 = vpow.pop %v277
    %v279 = vadd.f32 %v276, 1.0
    %v280 = vadd.f32 %v278, 1.0
    %v281 = vrcp.pop %v279
    %v282 = vmul.f32 1.0, %v281
    %v283 = vrcp.pop %v280
    %v284 = vmul.f32 1.0, %v283
    %vm285 = vcmp.ge.f32.partialorder %v265, 0.0
    %vm286 = vcmp.ge.f32.partialorder %v266, 0.0
    %v287 = vmul.f32 %v276, %v282
    %v288 = vmul.f32 %v278, %v284
    %v289 = vsel %vm285, %v282, %v287
    %v290 = vsel %vm286, %v284, %v288
    %v291 = vsub.f32 1.0, %v289
    %v292 = vsub.f32 1.0, %v290
    %v293 = vmul.f32 %v291, %v269
    %v294 = vmul.f32 %v292, %v270
    %v295 = vsub.f32 1.0, %v269
    %v296 = vsub.f32 1.0, %v270
    %v297 = vmul.f32 %v289, %v295
    %v298 = vmul.f32 %v290, %v296
    %v299 = vadd.f32 %v293, %v297
    %v300 = vadd.f32 %v294, %v298
    %v301 = vmul.f32 %v299, %v299
    %v302 = vmul.f32 %v300, %v300
    %v303 = vmul.f32 %v269, 0.25
    %v304 = vmul.f32 %v270, 0.25
    %v305 = vmul.f32 %v295, 0.75
    %v306 = vmul.f32 %v296, 0.75
    %v307 = vadd.f32 %v303, %v305
    %v308 = vadd.f32 %v304, %v306
    %v309 = vmul.f32 %v307, %v301
    %v310 = vmul.f32 %v308, %v302
    %v311 = vmax.f32 %v265, 0.0
    %v312 = vmax.f32 %v266, 0.0
    %v313 = vmul.f32 %v265, %v269
    %v314 = vmul.f32 %v266, %v270
    %v315 = vsub.f32 %v311, %v313
    %v316 = vsub.f32 %v312, %v314
    %v317 = vlog2.pop %v279
    %v318 = vmul.f32 %v317, 0.6931472
    %v319 = vlog2.pop %v280
    %v320 = vmul.f32 %v319, 0.6931472
    %v321 = vadd.f32 %v315, %v318
    %v322 = vadd.f32 %v316, %v320
    %v323 = vmul.f32 %v321, %v309
    %v324 = vmul.f32 %v322, %v310
    %vm325 = vcmask 195584
    %v326 = vsel %vm325, %v323, 0.0
    %v327 = vsel %vm325, %v324, 0.0
    %v328 = vadd.f32 %v326, %v327
    %329 = vadd.xlane.f32.xlu0 %v328
    %v330 = vpop.xlane.xlu0 %329
    %v331 = vrot.slane %v330, 4
    %v332 = vadd.f32 %v330, %v331
    %v333 = vrot.slane %v332, 2
    %v334 = vadd.f32 %v332, %v333
    %v335 = vrot.slane %v334, 1
    %v336 = vadd.f32 %v334, %v335
    %s337 = vtos %v336
    %vm338 = vcmp.eq.s32.totalorder %v125, 0
    %v339 = vsel %vm338, 1, 0
    %vm340 = vcmp.eq.s32.totalorder %v339, 1
    %v341 = vsel %vm340, -3e+38, %v265
    %v342 = vsel %vm340, -3e+38, %v266
    %v343 = vsel %vm325, %v341, -inf
    %344 = vmax.xlane.f32.xlu0 %v343
    %v345 = vpop.xlane.xlu0 %344
    %v346 = vsel %vm325, %v342, -inf
    %347 = vmax.xlane.f32.xlu0 %v346
    %v348 = vpop.xlane.xlu0 %347
    %v349 = vsel %vm340, %v265, 0.0
    %v350 = vsel %vm340, %v266, 0.0
    %v351 = vsel %vm325, %v349, 0.0
    %352 = vadd.xlane.f32.xlu0 %v351
    %v353 = vpop.xlane.xlu0 %352
    %v354 = vsel %vm325, %v350, 0.0
    %355 = vadd.xlane.f32.xlu0 %v354
    %v356 = vpop.xlane.xlu0 %355
    %vm357 = vcmp.gt.f32.partialorder %v345, %v353
    %vm358 = vcmp.gt.f32.partialorder %v348, %v356
    %v359 = vsel %vm357, 1, 0
    %v360 = vsel %vm358, 1, 0
    %v361 = vcvt.s32.f32 %v359
    %v362 = vcvt.s32.f32 %v360
    %v365 = vlaneseq
    %v366 = vshrl.u32 %v365, 7
    %v367 = vsub.s32 %v125, %v366
    %v368 = vrot.slane %v361, %v367
    %v369 = vlaneseq
    %v370 = vshrl.u32 %v369, 7
    %v371 = vsub.s32 %v125, %v370
    %v372 = vrot.slane %v362, %v371
    %v373 = vsel %vm242, %v372, %v368
    %v375 = vsel %vm245, %v373, 0.0
    %376 = vadd.xlane.f32.xlu0 %v375
    %v377 = vpop.xlane.xlu0 %376
    %v378 = vsub.f32 %v377, %v206
    %v379 = vand.u32 2147483647, %v378
    %381 = vrot.lane.b32.xlu0 %v379, 127
    %v382 = vpop.permute.xlu0 %381
    %v384 = vsel %vm251, %v382, 0.0
    %385 = vadd.xlane.f32.xlu0 %v384
    %v386 = vpop.xlane.xlu0 %385
    %v387 = vrot.slane %v386, 4
    %v388 = vadd.f32 %v386, %v387
    %v389 = vrot.slane %v388, 2
    %v390 = vadd.f32 %v388, %v389
    %v391 = vrot.slane %v390, 1
    %v392 = vadd.f32 %v390, %v391
    %s393 = vtos %v392
    %s394 = smul.f32 %s393, %s117
    %v395 = vcvt.s32.f32 %v125
    %v397 = vrot.slane %v204, 4
    %v399 = vsub.f32 %v204, %v397
    %v400 = vand.u32 2147483647, %v399
    %vm401 = vcmask 1043456
    %v402 = vsel %vm401, %v400, 0.0
    %403 = vadd.xlane.f32.xlu0 %v402
    %v404 = vpop.xlane.xlu0 %403
    %v405 = vrot.slane %v404, 4
    %v406 = vadd.f32 %v404, %v405
    %v407 = vrot.slane %v406, 2
    %v408 = vadd.f32 %v406, %v407
    %v409 = vrot.slane %v408, 1
    %v410 = vadd.f32 %v408, %v409
    %s411 = vtos %v410
    %s412 = smul.f32 %s411, %s113
    %v413 = vmul.f32 %v204, 0.5
    %v415 = vrot.slane %v413, 2
    %v417 = vsub.f32 %v204, %v415
    %v418 = vadd.f32 %v204, %v415
    %v419 = vsub.f32 %v418, %v417
    %v421 = vrot.slane %v419, 1
    %v423 = vmul.f32 %v419, %v421
    %v425 = vrot.slane %v418, 4
    %v427 = vmin.f32 %v418, %v425
    %v429 = vrot.slane %v417, 4
    %v431 = vmax.f32 %v417, %v429
    %v432 = vsub.f32 %v427, %v431
    %v433 = vmax.f32 %v432, 0.0
    %v435 = vrot.slane %v433, 1
    %v437 = vmul.f32 %v433, %v435
    %v439 = vrot.slane %v423, 4
    %v441 = vadd.f32 %v423, %v439
    %v442 = vsub.f32 %v441, %v437
    %v443 = vadd.f32 %v442, 1e-07
    %v444 = vrcp.pop %v443
    %v445 = vmul.f32 %v437, %v444
    %v446 = vmax.f32 %v418, %v425
    %v447 = vmin.f32 %v417, %v429
    %v448 = vsub.f32 %v446, %v447
    %v450 = vrot.slane %v448, 1
    %v452 = vmul.f32 %v448, %v450
    %v453 = vsub.f32 %v452, %v442
    %v454 = vadd.f32 %v452, 1e-07
    %v455 = vrcp.pop %v454
    %v456 = vmul.f32 %v453, %v455
    %v457 = vsub.f32 %v445, %v456
    %v458 = vstv %s111
    %vm459 = vcmp.lt.f32.partialorder %v395, %v458
    %v460 = vsub.f32 1.0, %v457
    %v461 = vsel %vm459, %v460, 0.0
    %vm462 = vcmask 1040384
    %v463 = vsel %vm462, %v461, 0.0
    %464 = vadd.xlane.f32.xlu0 %v463
    %v465 = vpop.xlane.xlu0 %464
    %v466 = vrot.slane %v465, 4
    %v467 = vadd.f32 %v465, %v466
    %v468 = vrot.slane %v467, 2
    %v469 = vadd.f32 %v467, %v468
    %v470 = vrot.slane %v469, 1
    %v471 = vadd.f32 %v469, %v470
    %s472 = vtos %v471
    %s473 = smul.f32 %s472, %s113
    %v475 = vrot.slane %v205, 4
    %v477 = vsub.f32 %v205, %v475
    %v478 = vand.u32 2147483647, %v477
    %v479 = vsel %vm401, %v478, 0.0
    %480 = vadd.xlane.f32.xlu0 %v479
    %v481 = vpop.xlane.xlu0 %480
    %v482 = vrot.slane %v481, 4
    %v483 = vadd.f32 %v481, %v482
    %v484 = vrot.slane %v483, 2
    %v485 = vadd.f32 %v483, %v484
    %v486 = vrot.slane %v485, 1
    %v487 = vadd.f32 %v485, %v486
    %s488 = vtos %v487
    %s489 = smul.f32 %s488, %s114
    %v490 = vld [vmem:[#allocation10] sm:$0xf]
    %v491 = vld [vmem:[#allocation10 + $0x4] sm:$0xf]
    %v492 = vld [vmem:[#allocation10 + $0x8] sm:$0xf]
    %v493 = vld [vmem:[#allocation10 + $0xc] sm:$0xf]
    %v494 = vld [vmem:[#allocation10 + $0x10] sm:$0xf]
    %v495 = vld [vmem:[#allocation10 + $0x14] sm:$0xf]
    %v496 = vld [vmem:[#allocation10 + $0x18] sm:$0xf]
    %v497 = vld [vmem:[#allocation10 + $0x1c] sm:$0xf]
    %v498 = vld [vmem:[#allocation10 + $0x20] sm:$0xf]
    %v499 = vld [vmem:[#allocation10 + $0x24] sm:$0xf]
    %v500 = vld [vmem:[#allocation10 + $0x28] sm:$0xf]
    %v501 = vld [vmem:[#allocation10 + $0x2c] sm:$0xf]
    %v502 = vld [vmem:[#allocation10 + $0x30] sm:$0xf]
    %v503 = vld [vmem:[#allocation10 + $0x34] sm:$0xf]
    %v504 = vld [vmem:[#allocation10 + $0x38] sm:$0xf]
    %v505 = vld [vmem:[#allocation10 + $0x3c] sm:$0xf]
    %v506 = vunpack.c.l.bf16 %v490
    %v507 = vunpack.c.l.bf16 %v491
    %v508 = vunpack.c.l.bf16 %v492
    %v509 = vunpack.c.l.bf16 %v493
    %v510 = vunpack.c.l.bf16 %v494
    %v511 = vunpack.c.l.bf16 %v495
    %v512 = vunpack.c.l.bf16 %v496
    %v513 = vunpack.c.l.bf16 %v497
    %v514 = vunpack.c.l.bf16 %v498
    %v515 = vunpack.c.l.bf16 %v499
    %v516 = vunpack.c.l.bf16 %v500
    %v517 = vunpack.c.l.bf16 %v501
    %v518 = vunpack.c.l.bf16 %v502
    %v519 = vunpack.c.l.bf16 %v503
    %v520 = vunpack.c.l.bf16 %v504
    %v521 = vunpack.c.l.bf16 %v505
    %522 = vmatprep.subr.mxu0 0.0
    %523 = vmatpush1.xpose.msra.mxu0 %v521
    %524 = vmatprep.subr.mxu0 0.0
    %525 = vmatpush1.xpose.msra.mxu0 %v520
    %526 = vmatprep.subr.mxu0 0.0
    %527 = vmatpush1.xpose.msra.mxu0 %v519
    %528 = vmatprep.subr.mxu0 0.0
    %529 = vmatpush1.xpose.msra.mxu0 %v518
    %530 = vmatprep.subr.mxu0 0.0
    %531 = vmatpush1.xpose.msra.mxu0 %v517
    %532 = vmatprep.subr.mxu0 0.0
    %533 = vmatpush1.xpose.msra.mxu0 %v516
    %534 = vmatprep.subr.mxu0 0.0
    %535 = vmatpush1.xpose.msra.mxu0 %v515
    %536 = vmatprep.subr.mxu0 0.0
    %537 = vmatpush1.xpose.msra.mxu0 %v514
    %538 = vmatprep.subr.mxu0 0.0
    %539 = vmatpush1.xpose.msra.mxu0 %v513
    %540 = vmatprep.subr.mxu0 0.0
    %541 = vmatpush1.xpose.msra.mxu0 %v512
    %542 = vmatprep.subr.mxu0 0.0
    %543 = vmatpush1.xpose.msra.mxu0 %v511
    %544 = vmatprep.subr.mxu0 0.0
    %545 = vmatpush1.xpose.msra.mxu0 %v510
    %546 = vmatprep.subr.mxu0 0.0
    %547 = vmatpush1.xpose.msra.mxu0 %v509
    %548 = vmatprep.subr.mxu0 0.0
    %549 = vmatpush1.xpose.msra.mxu0 %v508
    %550 = vmatprep.subr.mxu0 0.0
    %551 = vmatpush1.xpose.msra.mxu0 %v507
    %552 = vmatprep.subr.mxu0 0.0
    %553 = vmatpush1.xpose.msra.mxu0 %v506
    %554 = vmatprep.subr.mxu0 0.0
    %555 = vmatpush2.xpose.msra.mxu0 0.0
    %556 = vmatprep.subr.mxu0 0.0
    %557 = vmatpush2.xpose.msra.mxu0 0.0
    %558 = vmatprep.subr.mxu0 0.0
    %559 = vmatpush2.xpose.msra.mxu0 0.0
    %560 = vmatprep.subr.mxu0 0.0
    %561 = vmatpush2.xpose.msra.mxu0 0.0
    %562 = vmatprep.subr.mxu0 0.0
    %563 = vmatpush2.xpose.msra.mxu0 0.0
    %564 = vmatprep.subr.mxu0 0.0
    %565 = vmatpush2.xpose.msra.mxu0 0.0
    %566 = vmatprep.subr.mxu0 0.0
    %567 = vmatpush2.xpose.msra.mxu0 0.0
    %568 = vmatprep.subr.mxu0 0.0
    %569 = vmatpush2.xpose.msra.mxu0 0.0
    %570 = vmatprep.subr.mxu0 0.0
    %571 = vmatpush2.xpose.msra.mxu0 0.0
    %572 = vmatprep.subr.mxu0 0.0
    %573 = vmatpush2.xpose.msra.mxu0 0.0
    %574 = vmatprep.subr.mxu0 0.0
    %575 = vmatpush2.xpose.msra.mxu0 0.0
    %576 = vmatprep.subr.mxu0 0.0
    %577 = vmatpush2.xpose.msra.mxu0 0.0
    %578 = vmatprep.subr.mxu0 0.0
    %579 = vmatpush2.xpose.msra.mxu0 0.0
    %580 = vmatprep.subr.mxu0 0.0
    %581 = vmatpush2.xpose.msra.mxu0 0.0
    %582 = vmatprep.subr.mxu0 0.0
    %583 = vmatpush2.xpose.msra.mxu0 0.0
    %584 = vmatprep.subr.mxu0 0.0
    %585 = vmatpush2.xpose.msra.mxu0 0.0
    %586 = vmatprep.mubr.f32.mxu0 0.0
    %587 = vmatmul.mubr.f32.gmra.mxu0 %v506
    %v588 = vpop.f32.mrf.mxu0
    %v589 = vadd.f32 0.0, %v588
    %v590 = vpop.f32.mrf.mxu0
    %591 = vmatprep.mubr.f32.mxu0 0.0
    %592 = vmatmul.mubr.f32.gmra.mxu0 %v507
    %v593 = vpop.f32.mrf.mxu0
    %v594 = vadd.f32 0.0, %v593
    %v595 = vpop.f32.mrf.mxu0
    %596 = vmatprep.mubr.f32.mxu0 0.0
    %597 = vmatmul.mubr.f32.gmra.mxu0 %v508
    %v598 = vpop.f32.mrf.mxu0
    %v599 = vadd.f32 0.0, %v598
    %v600 = vpop.f32.mrf.mxu0
    %601 = vmatprep.mubr.f32.mxu0 0.0
    %602 = vmatmul.mubr.f32.gmra.mxu0 %v509
    %v603 = vpop.f32.mrf.mxu0
    %v604 = vadd.f32 0.0, %v603
    %v605 = vpop.f32.mrf.mxu0
    %606 = vmatprep.mubr.f32.mxu0 0.0
    %607 = vmatmul.mubr.f32.gmra.mxu0 %v510
    %v608 = vpop.f32.mrf.mxu0
    %v609 = vadd.f32 0.0, %v608
    %v610 = vpop.f32.mrf.mxu0
    %611 = vmatprep.mubr.f32.mxu0 0.0
    %612 = vmatmul.mubr.f32.gmra.mxu0 %v511
    %v613 = vpop.f32.mrf.mxu0
    %v614 = vadd.f32 0.0, %v613
    %v615 = vpop.f32.mrf.mxu0
    %616 = vmatprep.mubr.f32.mxu0 0.0
    %617 = vmatmul.mubr.f32.gmra.mxu0 %v512
    %v618 = vpop.f32.mrf.mxu0
    %v619 = vadd.f32 0.0, %v618
    %v620 = vpop.f32.mrf.mxu0
    %621 = vmatprep.mubr.f32.mxu0 0.0
    %622 = vmatmul.mubr.f32.gmra.mxu0 %v513
    %v623 = vpop.f32.mrf.mxu0
    %v624 = vadd.f32 0.0, %v623
    %v625 = vpop.f32.mrf.mxu0
    %626 = vmatprep.mubr.f32.mxu0 0.0
    %627 = vmatmul.mubr.f32.gmra.mxu0 %v514
    %v628 = vpop.f32.mrf.mxu0
    %v629 = vadd.f32 0.0, %v628
    %v630 = vpop.f32.mrf.mxu0
    %631 = vmatprep.mubr.f32.mxu0 0.0
    %632 = vmatmul.mubr.f32.gmra.mxu0 %v515
    %v633 = vpop.f32.mrf.mxu0
    %v634 = vadd.f32 0.0, %v633
    %v635 = vpop.f32.mrf.mxu0
    %636 = vmatprep.mubr.f32.mxu0 0.0
    %637 = vmatmul.mubr.f32.gmra.mxu0 %v516
    %v638 = vpop.f32.mrf.mxu0
    %v639 = vadd.f32 0.0, %v638
    %v640 = vpop.f32.mrf.mxu0
    %641 = vmatprep.mubr.f32.mxu0 0.0
    %642 = vmatmul.mubr.f32.gmra.mxu0 %v517
    %v643 = vpop.f32.mrf.mxu0
    %v644 = vadd.f32 0.0, %v643
    %v645 = vpop.f32.mrf.mxu0
    %646 = vmatprep.mubr.f32.mxu0 0.0
    %647 = vmatmul.mubr.f32.gmra.mxu0 %v518
    %v648 = vpop.f32.mrf.mxu0
    %v649 = vadd.f32 0.0, %v648
    %v650 = vpop.f32.mrf.mxu0
    %651 = vmatprep.mubr.f32.mxu0 0.0
    %652 = vmatmul.mubr.f32.gmra.mxu0 %v519
    %v653 = vpop.f32.mrf.mxu0
    %v654 = vadd.f32 0.0, %v653
    %v655 = vpop.f32.mrf.mxu0
    %656 = vmatprep.mubr.f32.mxu0 0.0
    %657 = vmatmul.mubr.f32.gmra.mxu0 %v520
    %v658 = vpop.f32.mrf.mxu0
    %v659 = vadd.f32 0.0, %v658
    %v660 = vpop.f32.mrf.mxu0
    %661 = vmatprep.mubr.f32.mxu0 0.0
    %662 = vmatmul.mubr.f32.gmra.mxu0 %v521
    %v663 = vpop.f32.mrf.mxu0
    %v664 = vadd.f32 0.0, %v663
    %v665 = vpop.f32.mrf.mxu0
    %666 = vdwg.mxu0
    %v667 = vmul.f32 %v506, %v506
    %v668 = vmul.f32 %v507, %v507
    %v669 = vmul.f32 %v508, %v508
    %v670 = vmul.f32 %v509, %v509
    %v671 = vmul.f32 %v510, %v510
    %v672 = vmul.f32 %v511, %v511
    %v673 = vmul.f32 %v512, %v512
    %v674 = vmul.f32 %v513, %v513
    %v675 = vmul.f32 %v514, %v514
    %v676 = vmul.f32 %v515, %v515
    %v677 = vmul.f32 %v516, %v516
    %v678 = vmul.f32 %v517, %v517
    %v679 = vmul.f32 %v518, %v518
    %v680 = vmul.f32 %v519, %v519
    %v681 = vmul.f32 %v520, %v520
    %v682 = vmul.f32 %v521, %v521
    %683 = vadd.xlane.f32.xlu0 %v667
    %v684 = vpop.xlane.xlu0 %683
    %685 = vadd.xlane.f32.xlu0 %v668
    %v686 = vpop.xlane.xlu0 %685
    %687 = vadd.xlane.f32.xlu0 %v669
    %v688 = vpop.xlane.xlu0 %687
    %689 = vadd.xlane.f32.xlu0 %v670
    %v690 = vpop.xlane.xlu0 %689
    %691 = vadd.xlane.f32.xlu0 %v671
    %v692 = vpop.xlane.xlu0 %691
    %693 = vadd.xlane.f32.xlu0 %v672
    %v694 = vpop.xlane.xlu0 %693
    %695 = vadd.xlane.f32.xlu0 %v673
    %v696 = vpop.xlane.xlu0 %695
    %697 = vadd.xlane.f32.xlu0 %v674
    %v698 = vpop.xlane.xlu0 %697
    %699 = vadd.xlane.f32.xlu0 %v675
    %v700 = vpop.xlane.xlu0 %699
    %701 = vadd.xlane.f32.xlu0 %v676
    %v702 = vpop.xlane.xlu0 %701
    %703 = vadd.xlane.f32.xlu0 %v677
    %v704 = vpop.xlane.xlu0 %703
    %705 = vadd.xlane.f32.xlu0 %v678
    %v706 = vpop.xlane.xlu0 %705
    %707 = vadd.xlane.f32.xlu0 %v679
    %v708 = vpop.xlane.xlu0 %707
    %709 = vadd.xlane.f32.xlu0 %v680
    %v710 = vpop.xlane.xlu0 %709
    %711 = vadd.xlane.f32.xlu0 %v681
    %v712 = vpop.xlane.xlu0 %711
    %713 = vadd.xlane.f32.xlu0 %v682
    %v714 = vpop.xlane.xlu0 %713
    %715 = vxpose.xlu0.b32.start [1/16] %v684, 128
    %716 = vxpose.xlu0.b32.cont [2/16] %v686, 128
    %717 = vxpose.xlu0.b32.cont [3/16] %v688, 128
    %718 = vxpose.xlu0.b32.cont [4/16] %v690, 128
    %719 = vxpose.xlu0.b32.cont [5/16] %v692, 128
    %720 = vxpose.xlu0.b32.cont [6/16] %v694, 128
    %721 = vxpose.xlu0.b32.cont [7/16] %v696, 128
    %722 = vxpose.xlu0.b32.cont [8/16] %v698, 128
    %723 = vxpose.xlu0.b32.cont [9/16] %v700, 128
    %724 = vxpose.xlu0.b32.cont [10/16] %v702, 128
    %725 = vxpose.xlu0.b32.cont [11/16] %v704, 128
    %726 = vxpose.xlu0.b32.cont [12/16] %v706, 128
    %727 = vxpose.xlu0.b32.cont [13/16] %v708, 128
    %728 = vxpose.xlu0.b32.cont [14/16] %v710, 128
    %729 = vxpose.xlu0.b32.cont [15/16] %v712, 128
    %730 = vxpose.xlu0.b32.end [16/16] %v714, 128
    %v731 = vpop.trf.xlu0
    %v732 = vpop.trf.xlu0
    %v733 = vpop.trf.xlu0
    %v734 = vpop.trf.xlu0
    %v735 = vpop.trf.xlu0
    %v736 = vpop.trf.xlu0
    %v737 = vpop.trf.xlu0
    %v738 = vpop.trf.xlu0
    %v739 = vpop.trf.xlu0
    %v740 = vpop.trf.xlu0
    %v741 = vpop.trf.xlu0
    %v742 = vpop.trf.xlu0
    %v743 = vpop.trf.xlu0
    %v744 = vpop.trf.xlu0
    %v745 = vpop.trf.xlu0
    %v746 = vpop.trf.xlu0
    %v747 = vlaneseq
    %v748 = vshrl.u32 %v747, 7
    %v749 = vsub.s32 0, %v748
    %v750 = vrot.slane %v731, %v749
    %v751 = vadd.f32 %v684, %v750
    %v752 = vadd.f32 %v686, %v750
    %v753 = vadd.f32 %v688, %v750
    %v754 = vadd.f32 %v690, %v750
    %v755 = vadd.f32 %v692, %v750
    %v756 = vadd.f32 %v694, %v750
    %v757 = vadd.f32 %v696, %v750
    %v758 = vadd.f32 %v698, %v750
    %v759 = vadd.f32 %v700, %v750
    %v760 = vadd.f32 %v702, %v750
    %v761 = vadd.f32 %v704, %v750
    %v762 = vadd.f32 %v706, %v750
    %v763 = vadd.f32 %v708, %v750
    %v764 = vadd.f32 %v710, %v750
    %v765 = vadd.f32 %v712, %v750
    %v766 = vadd.f32 %v714, %v750
    %v767 = vmul.f32 %v589, 2.0
    %v768 = vmul.f32 %v594, 2.0
    %v769 = vmul.f32 %v599, 2.0
    %v770 = vmul.f32 %v604, 2.0
    %v771 = vmul.f32 %v609, 2.0
    %v772 = vmul.f32 %v614, 2.0
    %v773 = vmul.f32 %v619, 2.0
    %v774 = vmul.f32 %v624, 2.0
    %v775 = vmul.f32 %v629, 2.0
    %v776 = vmul.f32 %v634, 2.0
    %v777 = vmul.f32 %v639, 2.0
    %v778 = vmul.f32 %v644, 2.0
    %v779 = vmul.f32 %v649, 2.0
    %v780 = vmul.f32 %v654, 2.0
    %v781 = vmul.f32 %v659, 2.0
    %v782 = vmul.f32 %v664, 2.0
    %v783 = vsub.f32 %v751, %v767
    %v784 = vsub.f32 %v752, %v768
    %v785 = vsub.f32 %v753, %v769
    %v786 = vsub.f32 %v754, %v770
    %v787 = vsub.f32 %v755, %v771
    %v788 = vsub.f32 %v756, %v772
    %v789 = vsub.f32 %v757, %v773
    %v790 = vsub.f32 %v758, %v774
    %v791 = vsub.f32 %v759, %v775
    %v792 = vsub.f32 %v760, %v776
    %v793 = vsub.f32 %v761, %v777
    %v794 = vsub.f32 %v762, %v778
    %v795 = vsub.f32 %v763, %v779
    %v796 = vsub.f32 %v764, %v780
    %v797 = vsub.f32 %v765, %v781
    %v798 = vsub.f32 %v766, %v782
    %v799 = vmax.f32 %v783, 0.0
    %v800 = vmax.f32 %v784, 0.0
    %v801 = vmax.f32 %v785, 0.0
    %v802 = vmax.f32 %v786, 0.0
    %v803 = vmax.f32 %v787, 0.0
    %v804 = vmax.f32 %v788, 0.0
    %v805 = vmax.f32 %v789, 0.0
    %v806 = vmax.f32 %v790, 0.0
    %v807 = vmax.f32 %v791, 0.0
    %v808 = vmax.f32 %v792, 0.0
    %v809 = vmax.f32 %v793, 0.0
    %v810 = vmax.f32 %v794, 0.0
    %v811 = vmax.f32 %v795, 0.0
    %v812 = vmax.f32 %v796, 0.0
    %v813 = vmax.f32 %v797, 0.0
    %v814 = vmax.f32 %v798, 0.0
    %v815 = vadd.f32 %v799, 1e-12
    %v816 = vadd.f32 %v800, 1e-12
    %v817 = vadd.f32 %v801, 1e-12
    %v818 = vadd.f32 %v802, 1e-12
    %v819 = vadd.f32 %v803, 1e-12
    %v820 = vadd.f32 %v804, 1e-12
    %v821 = vadd.f32 %v805, 1e-12
    %v822 = vadd.f32 %v806, 1e-12
    %v823 = vadd.f32 %v807, 1e-12
    %v824 = vadd.f32 %v808, 1e-12
    %v825 = vadd.f32 %v809, 1e-12
    %v826 = vadd.f32 %v810, 1e-12
    %v827 = vadd.f32 %v811, 1e-12
    %v828 = vadd.f32 %v812, 1e-12
    %v829 = vadd.f32 %v813, 1e-12
    %v830 = vadd.f32 %v814, 1e-12
    %v831 = vrsqrt.pop %v815
    %v832 = vmul.f32 %v815, %v831
    %vm833 = vcmp.eq.f32.partialorder %v815, inf
    %v834 = vsel %vm833, %v815, %v832
    %vm835 = vcmp.eq.f32.partialorder %v815, 0.0
    %v836 = vand.u32 %v815, 2147483648
    %v837 = vsel %vm835, %v836, %v834
    %v838 = vrsqrt.pop %v816
    %v839 = vmul.f32 %v816, %v838
    %vm840 = vcmp.eq.f32.partialorder %v816, inf
    %v841 = vsel %vm840, %v816, %v839
    %vm842 = vcmp.eq.f32.partialorder %v816, 0.0
    %v843 = vand.u32 %v816, 2147483648
    %v844 = vsel %vm842, %v843, %v841
    %v845 = vrsqrt.pop %v817
    %v846 = vmul.f32 %v817, %v845
    %vm847 = vcmp.eq.f32.partialorder %v817, inf
    %v848 = vsel %vm847, %v817, %v846
    %vm849 = vcmp.eq.f32.partialorder %v817, 0.0
    %v850 = vand.u32 %v817, 2147483648
    %v851 = vsel %vm849, %v850, %v848
    %v852 = vrsqrt.pop %v818
    %v853 = vmul.f32 %v818, %v852
    %vm854 = vcmp.eq.f32.partialorder %v818, inf
    %v855 = vsel %vm854, %v818, %v853
    %vm856 = vcmp.eq.f32.partialorder %v818, 0.0
    %v857 = vand.u32 %v818, 2147483648
    %v858 = vsel %vm856, %v857, %v855
    %v859 = vrsqrt.pop %v819
    %v860 = vmul.f32 %v819, %v859
    %vm861 = vcmp.eq.f32.partialorder %v819, inf
    %v862 = vsel %vm861, %v819, %v860
    %vm863 = vcmp.eq.f32.partialorder %v819, 0.0
    %v864 = vand.u32 %v819, 2147483648
    %v865 = vsel %vm863, %v864, %v862
    %v866 = vrsqrt.pop %v820
    %v867 = vmul.f32 %v820, %v866
    %vm868 = vcmp.eq.f32.partialorder %v820, inf
    %v869 = vsel %vm868, %v820, %v867
    %vm870 = vcmp.eq.f32.partialorder %v820, 0.0
    %v871 = vand.u32 %v820, 2147483648
    %v872 = vsel %vm870, %v871, %v869
    %v873 = vrsqrt.pop %v821
    %v874 = vmul.f32 %v821, %v873
    %vm875 = vcmp.eq.f32.partialorder %v821, inf
    %v876 = vsel %vm875, %v821, %v874
    %vm877 = vcmp.eq.f32.partialorder %v821, 0.0
    %v878 = vand.u32 %v821, 2147483648
    %v879 = vsel %vm877, %v878, %v876
    %v880 = vrsqrt.pop %v822
    %v881 = vmul.f32 %v822, %v880
    %vm882 = vcmp.eq.f32.partialorder %v822, inf
    %v883 = vsel %vm882, %v822, %v881
    %vm884 = vcmp.eq.f32.partialorder %v822, 0.0
    %v885 = vand.u32 %v822, 2147483648
    %v886 = vsel %vm884, %v885, %v883
    %v887 = vrsqrt.pop %v823
    %v888 = vmul.f32 %v823, %v887
    %vm889 = vcmp.eq.f32.partialorder %v823, inf
    %v890 = vsel %vm889, %v823, %v888
    %vm891 = vcmp.eq.f32.partialorder %v823, 0.0
    %v892 = vand.u32 %v823, 2147483648
    %v893 = vsel %vm891, %v892, %v890
    %v894 = vrsqrt.pop %v824
    %v895 = vmul.f32 %v824, %v894
    %vm896 = vcmp.eq.f32.partialorder %v824, inf
    %v897 = vsel %vm896, %v824, %v895
    %vm898 = vcmp.eq.f32.partialorder %v824, 0.0
    %v899 = vand.u32 %v824, 2147483648
    %v900 = vsel %vm898, %v899, %v897
    %v901 = vrsqrt.pop %v825
    %v902 = vmul.f32 %v825, %v901
    %vm903 = vcmp.eq.f32.partialorder %v825, inf
    %v904 = vsel %vm903, %v825, %v902
    %vm905 = vcmp.eq.f32.partialorder %v825, 0.0
    %v906 = vand.u32 %v825, 2147483648
    %v907 = vsel %vm905, %v906, %v904
    %v908 = vrsqrt.pop %v826
    %v909 = vmul.f32 %v826, %v908
    %vm910 = vcmp.eq.f32.partialorder %v826, inf
    %v911 = vsel %vm910, %v826, %v909
    %vm912 = vcmp.eq.f32.partialorder %v826, 0.0
    %v913 = vand.u32 %v826, 2147483648
    %v914 = vsel %vm912, %v913, %v911
    %v915 = vrsqrt.pop %v827
    %v916 = vmul.f32 %v827, %v915
    %vm917 = vcmp.eq.f32.partialorder %v827, inf
    %v918 = vsel %vm917, %v827, %v916
    %vm919 = vcmp.eq.f32.partialorder %v827, 0.0
    %v920 = vand.u32 %v827, 2147483648
    %v921 = vsel %vm919, %v920, %v918
    %v922 = vrsqrt.pop %v828
    %v923 = vmul.f32 %v828, %v922
    %vm924 = vcmp.eq.f32.partialorder %v828, inf
    %v925 = vsel %vm924, %v828, %v923
    %vm926 = vcmp.eq.f32.partialorder %v828, 0.0
    %v927 = vand.u32 %v828, 2147483648
    %v928 = vsel %vm926, %v927, %v925
    %v929 = vrsqrt.pop %v829
    %v930 = vmul.f32 %v829, %v929
    %vm931 = vcmp.eq.f32.partialorder %v829, inf
    %v932 = vsel %vm931, %v829, %v930
    %vm933 = vcmp.eq.f32.partialorder %v829, 0.0
    %v934 = vand.u32 %v829, 2147483648
    %v935 = vsel %vm933, %v934, %v932
    %v936 = vrsqrt.pop %v830
    %v937 = vmul.f32 %v830, %v936
    %vm938 = vcmp.eq.f32.partialorder %v830, inf
    %v939 = vsel %vm938, %v830, %v937
    %vm940 = vcmp.eq.f32.partialorder %v830, 0.0
    %v941 = vand.u32 %v830, 2147483648
    %v942 = vsel %vm940, %v941, %v939
    %v943 = vsub.f32 8.0, %v837
    %v944 = vsub.f32 8.0, %v844
    %v945 = vsub.f32 8.0, %v851
    %v946 = vsub.f32 8.0, %v858
    %v947 = vsub.f32 8.0, %v865
    %v948 = vsub.f32 8.0, %v872
    %v949 = vsub.f32 8.0, %v879
    %v950 = vsub.f32 8.0, %v886
    %v951 = vsub.f32 8.0, %v893
    %v952 = vsub.f32 8.0, %v900
    %v953 = vsub.f32 8.0, %v907
    %v954 = vsub.f32 8.0, %v914
    %v955 = vsub.f32 8.0, %v921
    %v956 = vsub.f32 8.0, %v928
    %v957 = vsub.f32 8.0, %v935
    %v958 = vsub.f32 8.0, %v942
    %v959 = vmax.f32 %v943, 0.0
    %v960 = vmax.f32 %v944, 0.0
    %v961 = vmax.f32 %v945, 0.0
    %v962 = vmax.f32 %v946, 0.0
    %v963 = vmax.f32 %v947, 0.0
    %v964 = vmax.f32 %v948, 0.0
    %v965 = vmax.f32 %v949, 0.0
    %v966 = vmax.f32 %v950, 0.0
    %v967 = vmax.f32 %v951, 0.0
    %v968 = vmax.f32 %v952, 0.0
    %v969 = vmax.f32 %v953, 0.0
    %v970 = vmax.f32 %v954, 0.0
    %v971 = vmax.f32 %v955, 0.0
    %v972 = vmax.f32 %v956, 0.0
    %v973 = vmax.f32 %v957, 0.0
    %v974 = vmax.f32 %v958, 0.0
    %v975 = vlaneseq
    %v976 = vshrl.u32 %v975, 7
    %v977 = vadd.s32 %v976, 8
    %v978 = vadd.s32 %v976, 16
    %v979 = vadd.s32 %v976, 24
    %v980 = vadd.s32 %v976, 32
    %v981 = vadd.s32 %v976, 40
    %v982 = vadd.s32 %v976, 48
    %v983 = vadd.s32 %v976, 56
    %v984 = vadd.s32 %v976, 64
    %v985 = vadd.s32 %v976, 72
    %v986 = vadd.s32 %v976, 80
    %v987 = vadd.s32 %v976, 88
    %v988 = vadd.s32 %v976, 96
    %v989 = vadd.s32 %v976, 104
    %v990 = vadd.s32 %v976, 112
    %v991 = vadd.s32 %v976, 120
    %v992 = vcvt.s32.f32 %v976
    %v993 = vcvt.s32.f32 %v977
    %v994 = vcvt.s32.f32 %v978
    %v995 = vcvt.s32.f32 %v979
    %v996 = vcvt.s32.f32 %v980
    %v997 = vcvt.s32.f32 %v981
    %v998 = vcvt.s32.f32 %v982
    %v999 = vcvt.s32.f32 %v983
    %v1000 = vcvt.s32.f32 %v984
    %v1001 = vcvt.s32.f32 %v985
    %v1002 = vcvt.s32.f32 %v986
    %v1003 = vcvt.s32.f32 %v987
    %v1004 = vcvt.s32.f32 %v988
    %v1005 = vcvt.s32.f32 %v989
    %v1006 = vcvt.s32.f32 %v990
    %v1007 = vcvt.s32.f32 %v991
    %vm1008 = vcmp.lt.f32.partialorder %v395, %v992
    %vm1009 = vcmp.lt.f32.partialorder %v395, %v993
    %vm1010 = vcmp.lt.f32.partialorder %v395, %v994
    %vm1011 = vcmp.lt.f32.partialorder %v395, %v995
    %vm1012 = vcmp.lt.f32.partialorder %v395, %v996
    %vm1013 = vcmp.lt.f32.partialorder %v395, %v997
    %vm1014 = vcmp.lt.f32.partialorder %v395, %v998
    %vm1015 = vcmp.lt.f32.partialorder %v395, %v999
    %vm1016 = vcmp.lt.f32.partialorder %v395, %v1000
    %vm1017 = vcmp.lt.f32.partialorder %v395, %v1001
    %vm1018 = vcmp.lt.f32.partialorder %v395, %v1002
    %vm1019 = vcmp.lt.f32.partialorder %v395, %v1003
    %vm1020 = vcmp.lt.f32.partialorder %v395, %v1004
    %vm1021 = vcmp.lt.f32.partialorder %v395, %v1005
    %vm1022 = vcmp.lt.f32.partialorder %v395, %v1006
    %vm1023 = vcmp.lt.f32.partialorder %v395, %v1007
    %v1024 = vstv %s112
    %vm1025 = vcmp.lt.f32.partialorder %v992, %v1024
    %vm1026 = vcmp.lt.f32.partialorder %v993, %v1024
    %vm1027 = vcmp.lt.f32.partialorder %v994, %v1024
    %vm1028 = vcmp.lt.f32.partialorder %v995, %v1024
    %vm1029 = vcmp.lt.f32.partialorder %v996, %v1024
    %vm1030 = vcmp.lt.f32.partialorder %v997, %v1024
    %vm1031 = vcmp.lt.f32.partialorder %v998, %v1024
    %vm1032 = vcmp.lt.f32.partialorder %v999, %v1024
    %vm1033 = vcmp.lt.f32.partialorder %v1000, %v1024
    %vm1034 = vcmp.lt.f32.partialorder %v1001, %v1024
    %vm1035 = vcmp.lt.f32.partialorder %v1002, %v1024
    %vm1036 = vcmp.lt.f32.partialorder %v1003, %v1024
    %vm1037 = vcmp.lt.f32.partialorder %v1004, %v1024
    %vm1038 = vcmp.lt.f32.partialorder %v1005, %v1024
    %vm1039 = vcmp.lt.f32.partialorder %v1006, %v1024
    %vm1040 = vcmp.lt.f32.partialorder %v1007, %v1024
    %v1041 = vsel %vm1025, 1, 0
    %v1042 = vsel %vm1026, 1, 0
    %v1043 = vsel %vm1027, 1, 0
    %v1044 = vsel %vm1028, 1, 0
    %v1045 = vsel %vm1029, 1, 0
    %v1046 = vsel %vm1030, 1, 0
    %v1047 = vsel %vm1031, 1, 0
    %v1048 = vsel %vm1032, 1, 0
    %v1049 = vsel %vm1033, 1, 0
    %v1050 = vsel %vm1034, 1, 0
    %v1051 = vsel %vm1035, 1, 0
    %v1052 = vsel %vm1036, 1, 0
    %v1053 = vsel %vm1037, 1, 0
    %v1054 = vsel %vm1038, 1, 0
    %v1055 = vsel %vm1039, 1, 0
    %v1056 = vsel %vm1040, 1, 0
    %vm1057 = vcmp.eq.s32.totalorder %v1041, 1
    %vm1058 = vcmp.eq.s32.totalorder %v1042, 1
    %vm1059 = vcmp.eq.s32.totalorder %v1043, 1
    %vm1060 = vcmp.eq.s32.totalorder %v1044, 1
    %vm1061 = vcmp.eq.s32.totalorder %v1045, 1
    %vm1062 = vcmp.eq.s32.totalorder %v1046, 1
    %vm1063 = vcmp.eq.s32.totalorder %v1047, 1
    %vm1064 = vcmp.eq.s32.totalorder %v1048, 1
    %vm1065 = vcmp.eq.s32.totalorder %v1049, 1
    %vm1066 = vcmp.eq.s32.totalorder %v1050, 1
    %vm1067 = vcmp.eq.s32.totalorder %v1051, 1
    %vm1068 = vcmp.eq.s32.totalorder %v1052, 1
    %vm1069 = vcmp.eq.s32.totalorder %v1053, 1
    %vm1070 = vcmp.eq.s32.totalorder %v1054, 1
    %vm1071 = vcmp.eq.s32.totalorder %v1055, 1
    %vm1072 = vcmp.eq.s32.totalorder %v1056, 1
    %vm1073 = vmand %vm1008, %vm1057
    %vm1074 = vmand %vm1009, %vm1058
    %vm1075 = vmand %vm1010, %vm1059
    %vm1076 = vmand %vm1011, %vm1060
    %vm1077 = vmand %vm1012, %vm1061
    %vm1078 = vmand %vm1013, %vm1062
    %vm1079 = vmand %vm1014, %vm1063
    %vm1080 = vmand %vm1015, %vm1064
    %vm1081 = vmand %vm1016, %vm1065
    %vm1082 = vmand %vm1017, %vm1066
    %vm1083 = vmand %vm1018, %vm1067
    %vm1084 = vmand %vm1019, %vm1068
    %vm1085 = vmand %vm1020, %vm1069
    %vm1086 = vmand %vm1021, %vm1070
    %vm1087 = vmand %vm1022, %vm1071
    %vm1088 = vmand %vm1023, %vm1072
    %vm1089 = vcmp.lt.f32.partialorder %v395, %v1024
    %v1090 = vsel %vm1089, 1, 0
    %vm1091 = vcmp.eq.s32.totalorder %v1090, 1
    %vm1092 = vmand %vm1073, %vm1091
    %vm1093 = vmand %vm1074, %vm1091
    %vm1094 = vmand %vm1075, %vm1091
    %vm1095 = vmand %vm1076, %vm1091
    %vm1096 = vmand %vm1077, %vm1091
    %vm1097 = vmand %vm1078, %vm1091
    %vm1098 = vmand %vm1079, %vm1091
    %vm1099 = vmand %vm1080, %vm1091
    %vm1100 = vmand %vm1081, %vm1091
    %vm1101 = vmand %vm1082, %vm1091
    %vm1102 = vmand %vm1083, %vm1091
    %vm1103 = vmand %vm1084, %vm1091
    %vm1104 = vmand %vm1085, %vm1091
    %vm1105 = vmand %vm1086, %vm1091
    %vm1106 = vmand %vm1087, %vm1091
    %vm1107 = vmand %vm1088, %vm1091
    %v1108 = vmul.f32 %v959, %v959
    %v1109 = vmul.f32 %v960, %v960
    %v1110 = vmul.f32 %v961, %v961
    %v1111 = vmul.f32 %v962, %v962
    %v1112 = vmul.f32 %v963, %v963
    %v1113 = vmul.f32 %v964, %v964
    %v1114 = vmul.f32 %v965, %v965
    %v1115 = vmul.f32 %v966, %v966
    %v1116 = vmul.f32 %v967, %v967
    %v1117 = vmul.f32 %v968, %v968
    %v1118 = vmul.f32 %v969, %v969
    %v1119 = vmul.f32 %v970, %v970
    %v1120 = vmul.f32 %v971, %v971
    %v1121 = vmul.f32 %v972, %v972
    %v1122 = vmul.f32 %v973, %v973
    %v1123 = vmul.f32 %v974, %v974
    %v1124 = vsel %vm1092, %v1108, 0.0
    %v1125 = vsel %vm1093, %v1109, 0.0
    %v1126 = vsel %vm1094, %v1110, 0.0
    %v1127 = vsel %vm1095, %v1111, 0.0
    %v1128 = vsel %vm1096, %v1112, 0.0
    %v1129 = vsel %vm1097, %v1113, 0.0
    %v1130 = vsel %vm1098, %v1114, 0.0
    %v1131 = vsel %vm1099, %v1115, 0.0
    %v1132 = vsel %vm1100, %v1116, 0.0
    %v1133 = vsel %vm1101, %v1117, 0.0
    %v1134 = vsel %vm1102, %v1118, 0.0
    %v1135 = vsel %vm1103, %v1119, 0.0
    %v1136 = vsel %vm1104, %v1120, 0.0
    %v1137 = vsel %vm1105, %v1121, 0.0
    %v1138 = vsel %vm1106, %v1122, 0.0
    %v1139 = vsel %vm1107, %v1123, 0.0
    %v1140 = vadd.f32 %v1124, %v1125
    %v1141 = vadd.f32 %v1140, %v1126
    %v1142 = vadd.f32 %v1141, %v1127
    %v1143 = vadd.f32 %v1142, %v1128
    %v1144 = vadd.f32 %v1143, %v1129
    %v1145 = vadd.f32 %v1144, %v1130
    %v1146 = vadd.f32 %v1145, %v1131
    %v1147 = vadd.f32 %v1146, %v1132
    %v1148 = vadd.f32 %v1147, %v1133
    %v1149 = vadd.f32 %v1148, %v1134
    %v1150 = vadd.f32 %v1149, %v1135
    %v1151 = vadd.f32 %v1150, %v1136
    %v1152 = vadd.f32 %v1151, %v1137
    %v1153 = vadd.f32 %v1152, %v1138
    %v1154 = vadd.f32 %v1153, %v1139
    %1155 = vadd.xlane.f32.xlu0 %v1154
    %v1156 = vpop.xlane.xlu0 %1155
    %v1157 = vrot.slane %v1156, 4
    %v1158 = vadd.f32 %v1156, %v1157
    %v1159 = vrot.slane %v1158, 2
    %v1160 = vadd.f32 %v1158, %v1159
    %v1161 = vrot.slane %v1160, 1
    %v1162 = vadd.f32 %v1160, %v1161
    %s1163 = vtos %v1162
    %s1164 = smul.f32 %s1163, %s115
    %v1165 = vld [vmem:[#allocation12] sm:$0xf]
    %v1166 = vld [vmem:[#allocation12 + $0x4] sm:$0xf]
    %v1167 = vld [vmem:[#allocation12 + $0x8] sm:$0xf]
    %v1168 = vld [vmem:[#allocation12 + $0xc] sm:$0xf]
    %v1169 = vld [vmem:[#allocation12 + $0x10] sm:$0xf]
    %v1170 = vld [vmem:[#allocation12 + $0x14] sm:$0xf]
    %v1171 = vld [vmem:[#allocation12 + $0x18] sm:$0xf]
    %v1172 = vld [vmem:[#allocation12 + $0x1c] sm:$0xf]
    %v1173 = vld [vmem:[#allocation12 + $0x20] sm:$0xf]
    %v1174 = vld [vmem:[#allocation12 + $0x24] sm:$0xf]
    %v1175 = vld [vmem:[#allocation12 + $0x28] sm:$0xf]
    %v1176 = vld [vmem:[#allocation12 + $0x2c] sm:$0xf]
    %v1177 = vld [vmem:[#allocation12 + $0x30] sm:$0xf]
    %v1178 = vld [vmem:[#allocation12 + $0x34] sm:$0xf]
    %v1179 = vld [vmem:[#allocation12 + $0x38] sm:$0xf]
    %v1180 = vld [vmem:[#allocation12 + $0x3c] sm:$0xf]
    %v1181 = vld [vmem:[#allocation12 + $0x40] sm:$0xf]
    %v1182 = vld [vmem:[#allocation12 + $0x44] sm:$0xf]
    %v1183 = vld [vmem:[#allocation12 + $0x48] sm:$0xf]
    %v1184 = vld [vmem:[#allocation12 + $0x4c] sm:$0xf]
    %v1185 = vld [vmem:[#allocation12 + $0x50] sm:$0xf]
    %v1186 = vld [vmem:[#allocation12 + $0x54] sm:$0xf]
    %v1187 = vld [vmem:[#allocation12 + $0x58] sm:$0xf]
    %v1188 = vld [vmem:[#allocation12 + $0x5c] sm:$0xf]
    %v1189 = vld [vmem:[#allocation12 + $0x60] sm:$0xf]
    %v1190 = vld [vmem:[#allocation12 + $0x64] sm:$0xf]
    %v1191 = vld [vmem:[#allocation12 + $0x68] sm:$0xf]
    %v1192 = vld [vmem:[#allocation12 + $0x6c] sm:$0xf]
    %v1193 = vld [vmem:[#allocation12 + $0x70] sm:$0xf]
    %v1194 = vld [vmem:[#allocation12 + $0x74] sm:$0xf]
    %v1195 = vld [vmem:[#allocation12 + $0x78] sm:$0xf]
    %v1196 = vld [vmem:[#allocation12 + $0x7c] sm:$0xf]
    %v1197 = vld [vmem:[#allocation12 + $0x80] sm:$0xf]
    %v1198 = vld [vmem:[#allocation12 + $0x84] sm:$0xf]
    %v1199 = vld [vmem:[#allocation12 + $0x88] sm:$0xf]
    %v1200 = vld [vmem:[#allocation12 + $0x8c] sm:$0xf]
    %v1201 = vld [vmem:[#allocation12 + $0x90] sm:$0xf]
    %v1202 = vld [vmem:[#allocation12 + $0x94] sm:$0xf]
    %v1203 = vld [vmem:[#allocation12 + $0x98] sm:$0xf]
    %v1204 = vld [vmem:[#allocation12 + $0x9c] sm:$0xf]
    %v1205 = vld [vmem:[#allocation12 + $0xa0] sm:$0xf]
    %v1206 = vld [vmem:[#allocation12 + $0xa4] sm:$0xf]
    %v1207 = vld [vmem:[#allocation12 + $0xa8] sm:$0xf]
    %v1208 = vld [vmem:[#allocation12 + $0xac] sm:$0xf]
    %v1209 = vld [vmem:[#allocation12 + $0xb0] sm:$0xf]
    %v1210 = vld [vmem:[#allocation12 + $0xb4] sm:$0xf]
    %v1211 = vld [vmem:[#allocation12 + $0xb8] sm:$0xf]
    %v1212 = vld [vmem:[#allocation12 + $0xbc] sm:$0xf]
    %v1213 = vld [vmem:[#allocation12 + $0xc0] sm:$0xf]
    %v1214 = vld [vmem:[#allocation12 + $0xc4] sm:$0xf]
    %v1215 = vld [vmem:[#allocation12 + $0xc8] sm:$0xf]
    %v1216 = vld [vmem:[#allocation12 + $0xcc] sm:$0xf]
    %v1217 = vld [vmem:[#allocation12 + $0xd0] sm:$0xf]
    %v1218 = vld [vmem:[#allocation12 + $0xd4] sm:$0xf]
    %v1219 = vld [vmem:[#allocation12 + $0xd8] sm:$0xf]
    %v1220 = vld [vmem:[#allocation12 + $0xdc] sm:$0xf]
    %v1221 = vld [vmem:[#allocation12 + $0xe0] sm:$0xf]
    %v1222 = vld [vmem:[#allocation12 + $0xe4] sm:$0xf]
    %v1223 = vld [vmem:[#allocation12 + $0xe8] sm:$0xf]
    %v1224 = vld [vmem:[#allocation12 + $0xec] sm:$0xf]
    %v1225 = vld [vmem:[#allocation12 + $0xf0] sm:$0xf]
    %v1226 = vld [vmem:[#allocation12 + $0xf4] sm:$0xf]
    %v1227 = vld [vmem:[#allocation12 + $0xf8] sm:$0xf]
    %v1228 = vld [vmem:[#allocation12 + $0xfc] sm:$0xf]
    %v1229 = vunpack.c.l.bf16 %v1165
    %v1230 = vunpack.c.l.bf16 %v1166
    %v1231 = vunpack.c.l.bf16 %v1167
    %v1232 = vunpack.c.l.bf16 %v1168
    %v1233 = vunpack.c.l.bf16 %v1169
    %v1234 = vunpack.c.l.bf16 %v1170
    %v1235 = vunpack.c.l.bf16 %v1171
    %v1236 = vunpack.c.l.bf16 %v1172
    %v1237 = vunpack.c.l.bf16 %v1173
    %v1238 = vunpack.c.l.bf16 %v1174
    %v1239 = vunpack.c.l.bf16 %v1175
    %v1240 = vunpack.c.l.bf16 %v1176
    %v1241 = vunpack.c.l.bf16 %v1177
    %v1242 = vunpack.c.l.bf16 %v1178
    %v1243 = vunpack.c.l.bf16 %v1179
    %v1244 = vunpack.c.l.bf16 %v1180
    %v1245 = vunpack.c.l.bf16 %v1181
    %v1246 = vunpack.c.l.bf16 %v1182
    %v1247 = vunpack.c.l.bf16 %v1183
    %v1248 = vunpack.c.l.bf16 %v1184
    %v1249 = vunpack.c.l.bf16 %v1185
    %v1250 = vunpack.c.l.bf16 %v1186
    %v1251 = vunpack.c.l.bf16 %v1187
    %v1252 = vunpack.c.l.bf16 %v1188
    %v1253 = vunpack.c.l.bf16 %v1189
    %v1254 = vunpack.c.l.bf16 %v1190
    %v1255 = vunpack.c.l.bf16 %v1191
    %v1256 = vunpack.c.l.bf16 %v1192
    %v1257 = vunpack.c.l.bf16 %v1193
    %v1258 = vunpack.c.l.bf16 %v1194
    %v1259 = vunpack.c.l.bf16 %v1195
    %v1260 = vunpack.c.l.bf16 %v1196
    %v1261 = vunpack.c.l.bf16 %v1197
    %v1262 = vunpack.c.l.bf16 %v1198
    %v1263 = vunpack.c.l.bf16 %v1199
    %v1264 = vunpack.c.l.bf16 %v1200
    %v1265 = vunpack.c.l.bf16 %v1201
    %v1266 = vunpack.c.l.bf16 %v1202
    %v1267 = vunpack.c.l.bf16 %v1203
    %v1268 = vunpack.c.l.bf16 %v1204
    %v1269 = vunpack.c.l.bf16 %v1205
    %v1270 = vunpack.c.l.bf16 %v1206
    %v1271 = vunpack.c.l.bf16 %v1207
    %v1272 = vunpack.c.l.bf16 %v1208
    %v1273 = vunpack.c.l.bf16 %v1209
    %v1274 = vunpack.c.l.bf16 %v1210
    %v1275 = vunpack.c.l.bf16 %v1211
    %v1276 = vunpack.c.l.bf16 %v1212
    %v1277 = vunpack.c.l.bf16 %v1213
    %v1278 = vunpack.c.l.bf16 %v1214
    %v1279 = vunpack.c.l.bf16 %v1215
    %v1280 = vunpack.c.l.bf16 %v1216
    %v1281 = vunpack.c.l.bf16 %v1217
    %v1282 = vunpack.c.l.bf16 %v1218
    %v1283 = vunpack.c.l.bf16 %v1219
    %v1284 = vunpack.c.l.bf16 %v1220
    %v1285 = vunpack.c.l.bf16 %v1221
    %v1286 = vunpack.c.l.bf16 %v1222
    %v1287 = vunpack.c.l.bf16 %v1223
    %v1288 = vunpack.c.l.bf16 %v1224
    %v1289 = vunpack.c.l.bf16 %v1225
    %v1290 = vunpack.c.l.bf16 %v1226
    %v1291 = vunpack.c.l.bf16 %v1227
    %v1292 = vunpack.c.l.bf16 %v1228
    %v1293 = vsub.f32 %v1229, %v1261
    %v1294 = vsub.f32 %v1230, %v1262
    %v1295 = vsub.f32 %v1231, %v1263
    %v1296 = vsub.f32 %v1232, %v1264
    %v1297 = vsub.f32 %v1233, %v1265
    %v1298 = vsub.f32 %v1234, %v1266
    %v1299 = vsub.f32 %v1235, %v1267
    %v1300 = vsub.f32 %v1236, %v1268
    %v1301 = vsub.f32 %v1237, %v1269
    %v1302 = vsub.f32 %v1238, %v1270
    %v1303 = vsub.f32 %v1239, %v1271
    %v1304 = vsub.f32 %v1240, %v1272
    %v1305 = vsub.f32 %v1241, %v1273
    %v1306 = vsub.f32 %v1242, %v1274
    %v1307 = vsub.f32 %v1243, %v1275
    %v1308 = vsub.f32 %v1244, %v1276
    %v1309 = vsub.f32 %v1245, %v1277
    %v1310 = vsub.f32 %v1246, %v1278
    %v1311 = vsub.f32 %v1247, %v1279
    %v1312 = vsub.f32 %v1248, %v1280
    %v1313 = vsub.f32 %v1249, %v1281
    %v1314 = vsub.f32 %v1250, %v1282
    %v1315 = vsub.f32 %v1251, %v1283
    %v1316 = vsub.f32 %v1252, %v1284
    %v1317 = vsub.f32 %v1253, %v1285
    %v1318 = vsub.f32 %v1254, %v1286
    %v1319 = vsub.f32 %v1255, %v1287
    %v1320 = vsub.f32 %v1256, %v1288
    %v1321 = vsub.f32 %v1257, %v1289
    %v1322 = vsub.f32 %v1258, %v1290
    %v1323 = vsub.f32 %v1259, %v1291
    %v1324 = vsub.f32 %v1260, %v1292
    %v1325 = vmul.f32 %v1293, %v1293
    %v1326 = vmul.f32 %v1294, %v1294
    %v1327 = vmul.f32 %v1295, %v1295
    %v1328 = vmul.f32 %v1296, %v1296
    %v1329 = vmul.f32 %v1297, %v1297
    %v1330 = vmul.f32 %v1298, %v1298
    %v1331 = vmul.f32 %v1299, %v1299
    %v1332 = vmul.f32 %v1300, %v1300
    %v1333 = vmul.f32 %v1301, %v1301
    %v1334 = vmul.f32 %v1302, %v1302
    %v1335 = vmul.f32 %v1303, %v1303
    %v1336 = vmul.f32 %v1304, %v1304
    %v1337 = vmul.f32 %v1305, %v1305
    %v1338 = vmul.f32 %v1306, %v1306
    %v1339 = vmul.f32 %v1307, %v1307
    %v1340 = vmul.f32 %v1308, %v1308
    %v1341 = vmul.f32 %v1309, %v1309
    %v1342 = vmul.f32 %v1310, %v1310
    %v1343 = vmul.f32 %v1311, %v1311
    %v1344 = vmul.f32 %v1312, %v1312
    %v1345 = vmul.f32 %v1313, %v1313
    %v1346 = vmul.f32 %v1314, %v1314
    %v1347 = vmul.f32 %v1315, %v1315
    %v1348 = vmul.f32 %v1316, %v1316
    %v1349 = vmul.f32 %v1317, %v1317
    %v1350 = vmul.f32 %v1318, %v1318
    %v1351 = vmul.f32 %v1319, %v1319
    %v1352 = vmul.f32 %v1320, %v1320
    %v1353 = vmul.f32 %v1321, %v1321
    %v1354 = vmul.f32 %v1322, %v1322
    %v1355 = vmul.f32 %v1323, %v1323
    %v1356 = vmul.f32 %v1324, %v1324
    %v1357 = vadd.f32 %v1325, %v1326
    %v1358 = vadd.f32 %v1357, %v1327
    %v1359 = vadd.f32 %v1358, %v1328
    %v1360 = vadd.f32 %v1359, %v1329
    %v1361 = vadd.f32 %v1360, %v1330
    %v1362 = vadd.f32 %v1361, %v1331
    %v1363 = vadd.f32 %v1362, %v1332
    %v1364 = vadd.f32 %v1363, %v1333
    %v1365 = vadd.f32 %v1364, %v1334
    %v1366 = vadd.f32 %v1365, %v1335
    %v1367 = vadd.f32 %v1366, %v1336
    %v1368 = vadd.f32 %v1367, %v1337
    %v1369 = vadd.f32 %v1368, %v1338
    %v1370 = vadd.f32 %v1369, %v1339
    %v1371 = vadd.f32 %v1370, %v1340
    %v1372 = vadd.f32 %v1371, %v1341
    %v1373 = vadd.f32 %v1372, %v1342
    %v1374 = vadd.f32 %v1373, %v1343
    %v1375 = vadd.f32 %v1374, %v1344
    %v1376 = vadd.f32 %v1375, %v1345
    %v1377 = vadd.f32 %v1376, %v1346
    %v1378 = vadd.f32 %v1377, %v1347
    %v1379 = vadd.f32 %v1378, %v1348
    %v1380 = vadd.f32 %v1379, %v1349
    %v1381 = vadd.f32 %v1380, %v1350
    %v1382 = vadd.f32 %v1381, %v1351
    %v1383 = vadd.f32 %v1382, %v1352
    %v1384 = vadd.f32 %v1383, %v1353
    %v1385 = vadd.f32 %v1384, %v1354
    %v1386 = vadd.f32 %v1385, %v1355
    %v1387 = vadd.f32 %v1386, %v1356
    %1388 = vadd.xlane.f32.xlu0 %v1387
    %v1389 = vpop.xlane.xlu0 %1388
    %v1390 = vrot.slane %v1389, 4
    %v1391 = vadd.f32 %v1389, %v1390
    %v1392 = vrot.slane %v1391, 2
    %v1393 = vadd.f32 %v1391, %v1392
    %v1394 = vrot.slane %v1393, 1
    %v1395 = vadd.f32 %v1393, %v1394
    %s1396 = vtos %v1395
    %s1397 = smul.f32 %s1396, %s116
    %v1398 = vstv %s203
    %v1399 = vsel %vm338, %v1398, 0.0
    %vm1400 = vcmp.eq.s32.totalorder %v125, 1
    %v1401 = vstv %s262
    %v1402 = vsel %vm1400, %v1401, %v1399
    %vm1403 = vcmp.eq.s32.totalorder %v125, 2
    %v1404 = vstv %s412
    %v1405 = vsel %vm1403, %v1404, %v1402
    %vm1406 = vcmp.eq.s32.totalorder %v125, 3
    %v1407 = vstv %s473
    %v1408 = vsel %vm1406, %v1407, %v1405
    %vm1409 = vcmp.eq.s32.totalorder %v125, 4
    %v1410 = vstv %s337
    %v1411 = vsel %vm1409, %v1410, %v1408
    %vm1412 = vcmp.eq.s32.totalorder %v125, 5
    %v1413 = vstv %s394
    %v1414 = vsel %vm1412, %v1413, %v1411
    %vm1415 = vcmp.eq.s32.totalorder %v125, 6
    %v1416 = vstv %s489
    %v1417 = vsel %vm1415, %v1416, %v1414
    %vm1418 = vcmp.eq.s32.totalorder %v125, 7
    %v1419 = vstv %s1164
    %v1420 = vsel %vm1418, %v1419, %v1417
    %vm1421 = vcmp.eq.s32.totalorder %v125, 8
    %v1422 = vstv %s1397
    %v1423 = vsel %vm1421, %v1422, %v1420
    %1424 = vst [vmem:[#allocation13] sm:$0x1] %v1423
    // Predicated region
    $region58: #{tpu_custom_call.1} parent=1 // pred_check
      _
    $region59: #{tpu_custom_call.1} parent=1 // pred_check_branch
      %1426 = sbr.rel (0) target = $region61
    $region60: #{tpu_custom_call.1} parent=1 // pred_region
      %s1428 = ssub.s32 16, 16
      %1429 = vsyncadd [#allocation4], %s1428
      %s1431 = sshll.u32 [#allocation13], 4
      %s1432 = int_to_ptr.vmem [resolvable:$true] %s1431
      %1434 = dma.vmem_to_hbm [thread:$0]  %s1432, 16, %s8, [#allocation4]
    $region61: #{tpu_custom_call.1} parent=1 // pred_fallthru
      _
    // Predicated region
    $region62: #{tpu_custom_call.1} parent=1 // pred_check
      _
    $region63: #{tpu_custom_call.1} parent=1 // pred_check_branch
      %1436 = sbr.rel (0) target = $region65
    $region64: #{tpu_custom_call.1} parent=1 // pred_region
      %1437 = dma.done [#allocation4], 16
    $region65: #{tpu_custom_call.1} parent=1 // pred_fallthru
      _
    %1438 = vsyncpa [#allocation3], 1
    %1439 = vsyncpa [#allocation8], 1
    %1440 = vsyncpa [#allocation11], 1
    %1441 = vsyncpa [#allocation4], 1
    %1442 = vsyncpa [#allocation5], 1

</llo_original>
